<compile_context>
chip_gen: v6e
topology: v6e:2x2x1
jax: 0.10.0
libtpu: 0.0.40
codegen_flags: <defaults>
</compile_context>

<pallas_src>
import numpy as np
import jax
import jax.numpy as jnp
from jax.experimental import pallas as pl
from jax.experimental.pallas import tpu as pltpu

STATE_SIZE = 32
ACTION_SIZE = 4
FC1_UNITS = 400
FC2_UNITS = 300

# Lane-aligned (multiple-of-128) padded sizes used inside the kernel.
FC1_PAD = 512
FC2_PAD = 384
ACT_PAD = 128

BATCH = 8
BN_EPS = 1e-5


def actor_kernel(x_ref,
                 g1_ref, b1_ref,
                 w1_ref, bias1_ref,
                 g2_ref, b2_ref,
                 w2_ref, bias2_ref,
                 w3_ref, bias3_ref,
                 out_ref):
    x = x_ref[...]  # (B, STATE_SIZE) float32

    # ---- bn1: training-mode batch statistics, fused single pass ----
    mu1 = jnp.mean(x, axis=0, keepdims=True)
    var1 = jnp.maximum(jnp.mean(x * x, axis=0, keepdims=True) - mu1 * mu1, 0.0)
    x_bn = (x - mu1) * jax.lax.rsqrt(var1 + BN_EPS) * g1_ref[...] + b1_ref[...]

    # ---- fc1 (bf16 operands, f32 MXU accumulation) ----
    h1 = jnp.dot(x_bn.astype(jnp.bfloat16), w1_ref[...],
                 preferred_element_type=jnp.float32) + bias1_ref[...]

    # ---- bn2 -> relu (padded columns are exactly 0 and stay 0) ----
    mu2 = jnp.mean(h1, axis=0, keepdims=True)
    var2 = jnp.maximum(jnp.mean(h1 * h1, axis=0, keepdims=True) - mu2 * mu2, 0.0)
    h1_bn = (h1 - mu2) * jax.lax.rsqrt(var2 + BN_EPS) * g2_ref[...] + b2_ref[...]
    h1_act = jnp.maximum(h1_bn, 0.0)

    # ---- fc2 -> relu ----
    h2 = jnp.dot(h1_act.astype(jnp.bfloat16), w2_ref[...],
                 preferred_element_type=jnp.float32) + bias2_ref[...]
    h2_act = jnp.maximum(h2, 0.0)

    # ---- fc3 -> tanh ----
    h3 = jnp.dot(h2_act.astype(jnp.bfloat16), w3_ref[...],
                 preferred_element_type=jnp.float32) + bias3_ref[...]
    out_ref[...] = jnp.tanh(h3)


def _cost_estimate(batch):
    matmul_flops = 2 * batch * (STATE_SIZE * FC1_PAD
                                + FC1_PAD * FC2_PAD
                                + FC2_PAD * ACT_PAD)
    transcendentals = batch * ACT_PAD + (STATE_SIZE + FC1_PAD)  # tanh + rsqrt
    weight_bytes = 2 * (STATE_SIZE * FC1_PAD + FC1_PAD * FC2_PAD + FC2_PAD * ACT_PAD)
    other_bytes = 4 * (2 * STATE_SIZE + 2 * FC1_PAD          # bn params
                       + FC1_PAD + FC2_PAD + ACT_PAD         # biases
                       + batch * STATE_SIZE + batch * ACT_PAD)  # x + out
    return pl.CostEstimate(flops=matmul_flops,
                           transcendentals=transcendentals,
                           bytes_accessed=weight_bytes + other_bytes)


def actor_forward(x, params):
    """x: (B, STATE_SIZE) float32 -> (B, ACTION_SIZE) float32."""
    batch = x.shape[0]
    args = (
        x,
        params["bn1_gamma"], params["bn1_beta"],
        params["w1t"], params["b1"],
        params["bn2_gamma"], params["bn2_beta"],
        params["w2t"], params["b2"],
        params["w3t"], params["b3"],
    )
    vmem = pl.BlockSpec(memory_space=pltpu.MemorySpace.VMEM)
    out_padded = pl.pallas_call(
        actor_kernel,
        out_shape=jax.ShapeDtypeStruct((batch, ACT_PAD), jnp.float32),
        in_specs=[vmem] * len(args),
        out_specs=vmem,
        cost_estimate=_cost_estimate(batch),
    )(*args)
    # Slice the lane-dense (B, 128) output back to the true action dim.
    return out_padded[:, :ACTION_SIZE]


def init_params(key):
    """Deterministic init mirroring the PyTorch module's reset_parameters().

    NOTE: hidden_init uses weight.size()[0] == out_features in the original
    code, so lim = 1/sqrt(out_features) for fc1/fc2.
    """
    ks = jax.random.split(key, 6)
    lim1 = 1.0 / np.sqrt(FC1_UNITS)
    lim2 = 1.0 / np.sqrt(FC2_UNITS)

    # PyTorch Linear weights are (out, in).
    w1 = jax.random.uniform(ks[0], (FC1_UNITS, STATE_SIZE), jnp.float32, -lim1, lim1)
    w2 = jax.random.uniform(ks[1], (FC2_UNITS, FC1_UNITS), jnp.float32, -lim2, lim2)
    w3 = jax.random.uniform(ks[2], (ACTION_SIZE, FC2_UNITS), jnp.float32, -3e-3, 3e-3)

    # Biases keep PyTorch Linear default init: U(-1/sqrt(in), 1/sqrt(in)).
    b1 = jax.random.uniform(ks[3], (FC1_UNITS,), jnp.float32,
                            -1.0 / np.sqrt(STATE_SIZE), 1.0 / np.sqrt(STATE_SIZE))
    b2 = jax.random.uniform(ks[4], (FC2_UNITS,), jnp.float32,
                            -1.0 / np.sqrt(FC1_UNITS), 1.0 / np.sqrt(FC1_UNITS))
    b3 = jax.random.uniform(ks[5], (ACTION_SIZE,), jnp.float32,
                            -1.0 / np.sqrt(FC2_UNITS), 1.0 / np.sqrt(FC2_UNITS))

    def pad2(m, rows, cols):
        return jnp.pad(m, ((0, rows - m.shape[0]), (0, cols - m.shape[1])))

    def pad_row(v, n):
        return jnp.pad(v, (0, n - v.shape[0])).reshape(1, n)

    return {
        # BatchNorm params (f32). bn2 gamma is zero-padded so padded columns
        # stay exactly 0 through the BN affine transform.
        "bn1_gamma": jnp.ones((1, STATE_SIZE), jnp.float32),
        "bn1_beta": jnp.zeros((1, STATE_SIZE), jnp.float32),
        "bn2_gamma": pad_row(jnp.ones((FC1_UNITS,), jnp.float32), FC1_PAD),
        "bn2_beta": jnp.zeros((1, FC1_PAD), jnp.float32),
        # Pre-transposed, zero-padded, bf16 weights; f32 biases.
        "w1t": pad2(w1.T, STATE_SIZE, FC1_PAD).astype(jnp.bfloat16),
        "b1": pad_row(b1, FC1_PAD),
        "w2t": pad2(w2.T, FC1_PAD, FC2_PAD).astype(jnp.bfloat16),
        "b2": pad_row(b2, FC2_PAD),
        "w3t": pad2(w3.T, FC2_PAD, ACT_PAD).astype(jnp.bfloat16),
        "b3": pad_row(b3, ACT_PAD),
    }


def actor_reference(x, p):
    """Pure-JAX f32 reference using the same (bf16-rounded) weights."""
    w1 = p["w1t"][:, :FC1_UNITS].astype(jnp.float32)
    w2 = p["w2t"][:FC1_UNITS, :FC2_UNITS].astype(jnp.float32)
    w3 = p["w3t"][:FC2_UNITS, :ACTION_SIZE].astype(jnp.float32)
    b1 = p["b1"][:, :FC1_UNITS]
    b2 = p["b2"][:, :FC2_UNITS]
    b3 = p["b3"][:, :ACTION_SIZE]
    g2 = p["bn2_gamma"][:, :FC1_UNITS]
    be2 = p["bn2_beta"][:, :FC1_UNITS]

    def bn(h, g, b):
        mu = jnp.mean(h, axis=0, keepdims=True)
        var = jnp.mean((h - mu) ** 2, axis=0, keepdims=True)
        return (h - mu) * jax.lax.rsqrt(var + BN_EPS) * g + b

    h = bn(x, p["bn1_gamma"], p["bn1_beta"])
    h = jnp.maximum(bn(h @ w1 + b1, g2, be2), 0.0)
    h = jnp.maximum(h @ w2 + b2, 0.0)
    return jnp.tanh(h @ w3 + b3)


if __name__ == "__main__":
    key = jax.random.PRNGKey(0)
    k_x, k_p = jax.random.split(key)

    x = jax.random.normal(k_x, (BATCH, STATE_SIZE), jnp.float32)
    params = init_params(k_p)

    out = actor_forward(x, params)
    out = jax.block_until_ready(out)

    ref = actor_reference(x, params)
    # bf16 matmul operands inside the kernel -> loosened tolerance vs f32 ref.
    np.testing.assert_allclose(np.asarray(out), np.asarray(ref), rtol=2e-2, atol=2e-2)

    assert out.shape == (BATCH, ACTION_SIZE)
    # TODO(synk): eval-mode BatchNorm (running_mean/running_var) is not modeled;
    # kernel matches the module's default training-mode batch statistics.
    print("KERNEL_OK")
</pallas_src>

<mosaic_0001>
module attributes {stable_mosaic.version = 11 : i64} {
  func.func @actor_kernel(%arg0: memref<8x32xf32, #tpu.memory_space<vmem>>, %arg1: memref<1x32xf32, #tpu.memory_space<vmem>>, %arg2: memref<1x32xf32, #tpu.memory_space<vmem>>, %arg3: memref<32x512xbf16, #tpu.memory_space<vmem>>, %arg4: memref<1x512xf32, #tpu.memory_space<vmem>>, %arg5: memref<1x512xf32, #tpu.memory_space<vmem>>, %arg6: memref<1x512xf32, #tpu.memory_space<vmem>>, %arg7: memref<512x384xbf16, #tpu.memory_space<vmem>>, %arg8: memref<1x384xf32, #tpu.memory_space<vmem>>, %arg9: memref<384x128xbf16, #tpu.memory_space<vmem>>, %arg10: memref<1x128xf32, #tpu.memory_space<vmem>>, %arg11: memref<8x128xf32, #tpu.memory_space<vmem>>) attributes {dimension_semantics = [], scalar_prefetch = 0 : i64, scratch_operands = 0 : i64, tpu.core_type = #tpu.core_type<tc>} {
    %c0 = arith.constant 0 : index
    %c0_0 = arith.constant 0 : index
    %0 = vector.load %arg0[%c0, %c0_0] : memref<8x32xf32, #tpu.memory_space<vmem>>, vector<8x32xf32>
    %cst = arith.constant dense<0.000000e+00> : vector<32xf32>
    %1 = vector.multi_reduction <add>, %0, %cst [0] : vector<8x32xf32> to vector<32xf32>
    %2 = vector.shape_cast %1 : vector<32xf32> to vector<1x32xf32>
    %cst_1 = arith.constant 8.000000e+00 : f32
    %3 = vector.broadcast %cst_1 : f32 to vector<1x32xf32>
    %4 = arith.divf %2, %3 : vector<1x32xf32>
    %5 = arith.mulf %0, %0 : vector<8x32xf32>
    %cst_2 = arith.constant dense<0.000000e+00> : vector<32xf32>
    %6 = vector.multi_reduction <add>, %5, %cst_2 [0] : vector<8x32xf32> to vector<32xf32>
    %7 = vector.shape_cast %6 : vector<32xf32> to vector<1x32xf32>
    %cst_3 = arith.constant 8.000000e+00 : f32
    %8 = vector.broadcast %cst_3 : f32 to vector<1x32xf32>
    %9 = arith.divf %7, %8 : vector<1x32xf32>
    %10 = arith.mulf %4, %4 : vector<1x32xf32>
    %11 = arith.subf %9, %10 : vector<1x32xf32>
    %cst_4 = arith.constant 0.000000e+00 : f32
    %12 = vector.broadcast %cst_4 : f32 to vector<1x32xf32>
    %13 = arith.maximumf %11, %12 : vector<1x32xf32>
    %14 = vector.broadcast %4 : vector<1x32xf32> to vector<8x32xf32>
    %15 = arith.subf %0, %14 : vector<8x32xf32>
    %cst_5 = arith.constant 9.99999974E-6 : f32
    %16 = vector.broadcast %cst_5 : f32 to vector<1x32xf32>
    %17 = arith.addf %13, %16 : vector<1x32xf32>
    %18 = math.rsqrt %17 : vector<1x32xf32>
    %19 = vector.broadcast %18 : vector<1x32xf32> to vector<8x32xf32>
    %20 = arith.mulf %15, %19 : vector<8x32xf32>
    %c0_6 = arith.constant 0 : index
    %c0_7 = arith.constant 0 : index
    %21 = vector.load %arg1[%c0_6, %c0_7] : memref<1x32xf32, #tpu.memory_space<vmem>>, vector<1x32xf32>
    %22 = vector.broadcast %21 : vector<1x32xf32> to vector<8x32xf32>
    %23 = arith.mulf %20, %22 : vector<8x32xf32>
    %c0_8 = arith.constant 0 : index
    %c0_9 = arith.constant 0 : index
    %24 = vector.load %arg2[%c0_8, %c0_9] : memref<1x32xf32, #tpu.memory_space<vmem>>, vector<1x32xf32>
    %25 = vector.broadcast %24 : vector<1x32xf32> to vector<8x32xf32>
    %26 = arith.addf %23, %25 : vector<8x32xf32>
    %27 = arith.truncf %26 : vector<8x32xf32> to vector<8x32xbf16>
    %c0_10 = arith.constant 0 : index
    %c0_11 = arith.constant 0 : index
    %28 = vector.load %arg3[%c0_10, %c0_11] : memref<32x512xbf16, #tpu.memory_space<vmem>>, vector<32x512xbf16>
    %cst_12 = arith.constant dense<0.000000e+00> : vector<8x512xf32>
    %29 = tpu.matmul %27, %28, %cst_12 {dimension_numbers = #tpu.dot_dimension_numbers<[1], [0], [0], [1], [0, 0, 1, 1], [], []>} : vector<8x32xbf16>, vector<32x512xbf16>, vector<8x512xf32> -> vector<8x512xf32>
    %c0_13 = arith.constant 0 : index
    %c0_14 = arith.constant 0 : index
    %30 = vector.load %arg4[%c0_13, %c0_14] : memref<1x512xf32, #tpu.memory_space<vmem>>, vector<1x512xf32>
    %31 = vector.broadcast %30 : vector<1x512xf32> to vector<8x512xf32>
    %32 = arith.addf %29, %31 : vector<8x512xf32>
    %cst_15 = arith.constant dense<0.000000e+00> : vector<512xf32>
    %33 = vector.multi_reduction <add>, %32, %cst_15 [0] : vector<8x512xf32> to vector<512xf32>
    %34 = vector.shape_cast %33 : vector<512xf32> to vector<1x512xf32>
    %cst_16 = arith.constant 8.000000e+00 : f32
    %35 = vector.broadcast %cst_16 : f32 to vector<1x512xf32>
    %36 = arith.divf %34, %35 : vector<1x512xf32>
    %37 = arith.mulf %32, %32 : vector<8x512xf32>
    %cst_17 = arith.constant dense<0.000000e+00> : vector<512xf32>
    %38 = vector.multi_reduction <add>, %37, %cst_17 [0] : vector<8x512xf32> to vector<512xf32>
    %39 = vector.shape_cast %38 : vector<512xf32> to vector<1x512xf32>
    %cst_18 = arith.constant 8.000000e+00 : f32
    %40 = vector.broadcast %cst_18 : f32 to vector<1x512xf32>
    %41 = arith.divf %39, %40 : vector<1x512xf32>
    %42 = arith.mulf %36, %36 : vector<1x512xf32>
    %43 = arith.subf %41, %42 : vector<1x512xf32>
    %cst_19 = arith.constant 0.000000e+00 : f32
    %44 = vector.broadcast %cst_19 : f32 to vector<1x512xf32>
    %45 = arith.maximumf %43, %44 : vector<1x512xf32>
    %46 = vector.broadcast %36 : vector<1x512xf32> to vector<8x512xf32>
    %47 = arith.subf %32, %46 : vector<8x512xf32>
    %cst_20 = arith.constant 9.99999974E-6 : f32
    %48 = vector.broadcast %cst_20 : f32 to vector<1x512xf32>
    %49 = arith.addf %45, %48 : vector<1x512xf32>
    %50 = math.rsqrt %49 : vector<1x512xf32>
    %51 = vector.broadcast %50 : vector<1x512xf32> to vector<8x512xf32>
    %52 = arith.mulf %47, %51 : vector<8x512xf32>
    %c0_21 = arith.constant 0 : index
    %c0_22 = arith.constant 0 : index
    %53 = vector.load %arg5[%c0_21, %c0_22] : memref<1x512xf32, #tpu.memory_space<vmem>>, vector<1x512xf32>
    %54 = vector.broadcast %53 : vector<1x512xf32> to vector<8x512xf32>
    %55 = arith.mulf %52, %54 : vector<8x512xf32>
    %c0_23 = arith.constant 0 : index
    %c0_24 = arith.constant 0 : index
    %56 = vector.load %arg6[%c0_23, %c0_24] : memref<1x512xf32, #tpu.memory_space<vmem>>, vector<1x512xf32>
    %57 = vector.broadcast %56 : vector<1x512xf32> to vector<8x512xf32>
    %58 = arith.addf %55, %57 : vector<8x512xf32>
    %cst_25 = arith.constant 0.000000e+00 : f32
    %59 = vector.broadcast %cst_25 : f32 to vector<8x512xf32>
    %60 = arith.maximumf %58, %59 : vector<8x512xf32>
    %61 = arith.truncf %60 : vector<8x512xf32> to vector<8x512xbf16>
    %c0_26 = arith.constant 0 : index
    %c0_27 = arith.constant 0 : index
    %62 = vector.load %arg7[%c0_26, %c0_27] : memref<512x384xbf16, #tpu.memory_space<vmem>>, vector<512x384xbf16>
    %cst_28 = arith.constant dense<0.000000e+00> : vector<8x384xf32>
    %63 = tpu.matmul %61, %62, %cst_28 {dimension_numbers = #tpu.dot_dimension_numbers<[1], [0], [0], [1], [0, 0, 1, 1], [], []>} : vector<8x512xbf16>, vector<512x384xbf16>, vector<8x384xf32> -> vector<8x384xf32>
    %c0_29 = arith.constant 0 : index
    %c0_30 = arith.constant 0 : index
    %64 = vector.load %arg8[%c0_29, %c0_30] : memref<1x384xf32, #tpu.memory_space<vmem>>, vector<1x384xf32>
    %65 = vector.broadcast %64 : vector<1x384xf32> to vector<8x384xf32>
    %66 = arith.addf %63, %65 : vector<8x384xf32>
    %cst_31 = arith.constant 0.000000e+00 : f32
    %67 = vector.broadcast %cst_31 : f32 to vector<8x384xf32>
    %68 = arith.maximumf %66, %67 : vector<8x384xf32>
    %69 = arith.truncf %68 : vector<8x384xf32> to vector<8x384xbf16>
    %c0_32 = arith.constant 0 : index
    %c0_33 = arith.constant 0 : index
    %70 = vector.load %arg9[%c0_32, %c0_33] : memref<384x128xbf16, #tpu.memory_space<vmem>>, vector<384x128xbf16>
    %cst_34 = arith.constant dense<0.000000e+00> : vector<8x128xf32>
    %71 = tpu.matmul %69, %70, %cst_34 {dimension_numbers = #tpu.dot_dimension_numbers<[1], [0], [0], [1], [0, 0, 1, 1], [], []>} : vector<8x384xbf16>, vector<384x128xbf16>, vector<8x128xf32> -> vector<8x128xf32>
    %c0_35 = arith.constant 0 : index
    %c0_36 = arith.constant 0 : index
    %72 = vector.load %arg10[%c0_35, %c0_36] : memref<1x128xf32, #tpu.memory_space<vmem>>, vector<1x128xf32>
    %73 = vector.broadcast %72 : vector<1x128xf32> to vector<8x128xf32>
    %74 = arith.addf %71, %73 : vector<8x128xf32>
    %75 = math.tanh %74 : vector<8x128xf32>
    %c0_37 = arith.constant 0 : index
    %c0_38 = arith.constant 0 : index
    %76 = vector.load %arg11[%c0_37, %c0_38] : memref<8x128xf32, #tpu.memory_space<vmem>>, vector<8x128xf32>
    tpu.vector_store %arg11[%c0_37, %c0_38], %75 {strides = array<i32>} : memref<8x128xf32, #tpu.memory_space<vmem>>, vector<8x128xf32>,
    return
  }
}

</mosaic_0001>

<llo_original>
// kernel: tpu_custom_call.1
$region0: #{tpu_custom_call.1}
  #allocation0 [shape = 'u32[]', space=smem, size = 0x4, offset = 0x4, fixed_abs, tag = 'smem constant byte address 0x4 - core index']
  #allocation1 [shape = 'u32[144,128]{1,0:T(1,128)}', space=vmem, size = 0x12000, scoped, tag = 'internal scratch']
  %s0 = inlined_call_operand.hbm [shape: f32[8,32], index: 0, kind: input, shape index: {}]
  %s1 = inlined_call_operand.vmem [shape: f32[1,32], index: 1, kind: input, shape index: {}]
  %s2 = inlined_call_operand.hbm [shape: f32[1,32], index: 2, kind: input, shape index: {}]
  %s3 = inlined_call_operand.hbm [shape: bf16[32,512], index: 3, kind: input, shape index: {}]
  %s4 = inlined_call_operand.vmem [shape: f32[1,512], index: 4, kind: input, shape index: {}]
  %s5 = inlined_call_operand.vmem [shape: f32[1,512], index: 5, kind: input, shape index: {}]
  %s6 = inlined_call_operand.hbm [shape: f32[1,512], index: 6, kind: input, shape index: {}]
  %s7 = inlined_call_operand.hbm [shape: bf16[512,384], index: 7, kind: input, shape index: {}]
  %s8 = inlined_call_operand.vmem [shape: f32[1,384], index: 8, kind: input, shape index: {}]
  %s9 = inlined_call_operand.hbm [shape: bf16[384,128], index: 9, kind: input, shape index: {}]
  %s10 = inlined_call_operand.vmem [shape: f32[1,128], index: 10, kind: input, shape index: {}]
  %s11 = inlined_call_operand.hbm [shape: f32[8,128], index: 11, kind: output, shape index: {}]
  %s12 = sld [smem:[#allocation0]]
  $region78: #{tpu_custom_call.1} parent=0
    _
  %s14 = ssub.s32 1, %s12
  %s15 = scalar_select 0, %s14, %s12
  $region1: #{tpu_custom_call.1} parent=0
    #allocation2 [shape = 'u8[4096]{0}', space=vmem, size = 0x1000, scoped, tag = 'input window, operand 0, single buffered']
    #allocation3 [shape = 's32[1]{0}', space=sflag, size = 0x4, scoped, tag = 'scoped memory for tpu_custom_call.1']
    #allocation4 [shape = 's32[1]{0}', space=sflag, size = 0x4, scoped, tag = 'scoped memory for tpu_custom_call.1']
    #allocation5 [shape = 'u8[512]{0}', space=vmem, size = 0x400, scoped, tag = 'input window, operand 2, single buffered']
    #allocation6 [shape = 's32[1]{0}', space=sflag, size = 0x4, scoped, tag = 'scoped memory for tpu_custom_call.1']
    #allocation7 [shape = 'u8[32768]{0}', space=vmem, size = 0x8000, scoped, tag = 'input window, operand 3, single buffered']
    #allocation8 [shape = 'u8[2048]{0}', space=vmem, size = 0x800, scoped, tag = 'input window, operand 6, single buffered']
    #allocation9 [shape = 's32[1]{0}', space=sflag, size = 0x4, scoped, tag = 'scoped memory for tpu_custom_call.1']
    #allocation10 [shape = 'u8[393216]{0}', space=vmem, size = 0x60000, scoped, tag = 'input window, operand 7, single buffered']
    #allocation11 [shape = 'u8[98304]{0}', space=vmem, size = 0x18000, scoped, tag = 'input window, operand 9, single buffered']
    #allocation12 [shape = 's32[1]{0}', space=sflag, size = 0x4, scoped, tag = 'scoped memory for tpu_custom_call.1']
    #allocation13 [shape = 'u8[4096]{0}', space=vmem, size = 0x1000, scoped, tag = 'output window, operand 0, single buffered']
    %16 = vsyncpa [#allocation3], 0
    %17 = vsyncpa [#allocation6], 0
    %18 = vsyncpa [#allocation9], 0
    %19 = vsyncpa [#allocation12], 0
    %20 = vsyncpa [#allocation4], 0
    // Predicated region
    $region2: #{tpu_custom_call.1} parent=1 // pred_check
      _
    $region3: #{tpu_custom_call.1} parent=1 // pred_check_branch
      %22 = sbr.rel (0) target = $region5
    $region4: #{tpu_custom_call.1} parent=1 // pred_region
      %s24 = ssub.s32 128, 128
      %25 = vsyncadd [#allocation3], %s24
      %s27 = sshll.u32 [#allocation2], 4
      %s28 = int_to_ptr.vmem [resolvable:$true] %s27
      %30 = dma.hbm_to_vmem [thread:$0]  %s0, 128, %s28, [#allocation3]
    $region5: #{tpu_custom_call.1} parent=1 // pred_fallthru
      _
    // Predicated region
    $region6: #{tpu_custom_call.1} parent=1 // pred_check
      _
    $region7: #{tpu_custom_call.1} parent=1 // pred_check_branch
      %32 = sbr.rel (0) target = $region9
    $region8: #{tpu_custom_call.1} parent=1 // pred_region
      _
    $region9: #{tpu_custom_call.1} parent=1 // pred_fallthru
      _
    // Predicated region
    $region10: #{tpu_custom_call.1} parent=1 // pred_check
      _
    $region11: #{tpu_custom_call.1} parent=1 // pred_check_branch
      %34 = sbr.rel (0) target = $region13
    $region12: #{tpu_custom_call.1} parent=1 // pred_region
      %s36 = ssub.s32 16, 16
      %37 = vsyncadd [#allocation6], %s36
      %s39 = sshll.u32 [#allocation5], 4
      %s40 = int_to_ptr.vmem [resolvable:$true] %s39
      %42 = dma.hbm_to_vmem [thread:$0]  %s2, 16, %s40, [#allocation6]
    $region13: #{tpu_custom_call.1} parent=1 // pred_fallthru
      _
    // Predicated region
    $region14: #{tpu_custom_call.1} parent=1 // pred_check
      _
    $region15: #{tpu_custom_call.1} parent=1 // pred_check_branch
      %44 = sbr.rel (0) target = $region17
    $region16: #{tpu_custom_call.1} parent=1 // pred_region
      %s46 = ssub.s32 1024, 1024
      %47 = vsyncadd [#allocation6], %s46
      %s48 = sshll.u32 [#allocation7], 4
      %s49 = int_to_ptr.vmem [resolvable:$true] %s48
      %54 = dma.hbm_to_vmem [thread:$0]  %s3, 1024, %s49, [#allocation6], 256, 256, 16
    $region17: #{tpu_custom_call.1} parent=1 // pred_fallthru
      _
    // Predicated region
    $region18: #{tpu_custom_call.1} parent=1 // pred_check
      _
    $region19: #{tpu_custom_call.1} parent=1 // pred_check_branch
      %56 = sbr.rel (0) target = $region21
    $region20: #{tpu_custom_call.1} parent=1 // pred_region
      _
    $region21: #{tpu_custom_call.1} parent=1 // pred_fallthru
      _
    // Predicated region
    $region22: #{tpu_custom_call.1} parent=1 // pred_check
      _
    $region23: #{tpu_custom_call.1} parent=1 // pred_check_branch
      %58 = sbr.rel (0) target = $region25
    $region24: #{tpu_custom_call.1} parent=1 // pred_region
      _
    $region25: #{tpu_custom_call.1} parent=1 // pred_fallthru
      _
    // Predicated region
    $region26: #{tpu_custom_call.1} parent=1 // pred_check
      _
    $region27: #{tpu_custom_call.1} parent=1 // pred_check_branch
      %60 = sbr.rel (0) target = $region29
    $region28: #{tpu_custom_call.1} parent=1 // pred_region
      %s62 = ssub.s32 64, 64
      %63 = vsyncadd [#allocation9], %s62
      %s65 = sshll.u32 [#allocation8], 4
      %s66 = int_to_ptr.vmem [resolvable:$true] %s65
      %68 = dma.hbm_to_vmem [thread:$0]  %s6, 64, %s66, [#allocation9]
    $region29: #{tpu_custom_call.1} parent=1 // pred_fallthru
      _
    // Predicated region
    $region30: #{tpu_custom_call.1} parent=1 // pred_check
      _
    $region31: #{tpu_custom_call.1} parent=1 // pred_check_branch
      %70 = sbr.rel (0) target = $region33
    $region32: #{tpu_custom_call.1} parent=1 // pred_region
      %s72 = ssub.s32 12288, 12288
      %73 = vsyncadd [#allocation9], %s72
      %s74 = sshll.u32 [#allocation10], 4
      %s75 = int_to_ptr.vmem [resolvable:$true] %s74
      %80 = dma.hbm_to_vmem [thread:$0]  %s7, 12288, %s75, [#allocation9], 192, 192, 12
    $region33: #{tpu_custom_call.1} parent=1 // pred_fallthru
      _
    // Predicated region
    $region34: #{tpu_custom_call.1} parent=1 // pred_check
      _
    $region35: #{tpu_custom_call.1} parent=1 // pred_check_branch
      %82 = sbr.rel (0) target = $region37
    $region36: #{tpu_custom_call.1} parent=1 // pred_region
      _
    $region37: #{tpu_custom_call.1} parent=1 // pred_fallthru
      _
    // Predicated region
    $region38: #{tpu_custom_call.1} parent=1 // pred_check
      _
    $region39: #{tpu_custom_call.1} parent=1 // pred_check_branch
      %84 = sbr.rel (0) target = $region41
    $region40: #{tpu_custom_call.1} parent=1 // pred_region
      %s86 = ssub.s32 3072, 3072
      %87 = vsyncadd [#allocation12], %s86
      %s88 = sshll.u32 [#allocation11], 4
      %s89 = int_to_ptr.vmem [resolvable:$true] %s88
      %94 = dma.hbm_to_vmem [thread:$0]  %s9, 3072, %s89, [#allocation12], 64, 64, 4
    $region41: #{tpu_custom_call.1} parent=1 // pred_fallthru
      _
    // Predicated region
    $region42: #{tpu_custom_call.1} parent=1 // pred_check
      _
    $region43: #{tpu_custom_call.1} parent=1 // pred_check_branch
      %96 = sbr.rel (0) target = $region45
    $region44: #{tpu_custom_call.1} parent=1 // pred_region
      _
    $region45: #{tpu_custom_call.1} parent=1 // pred_fallthru
      _
    // Predicated region
    $region46: #{tpu_custom_call.1} parent=1 // pred_check
      _
    $region47: #{tpu_custom_call.1} parent=1 // pred_check_branch
      %98 = sbr.rel (0) target = $region49
    $region48: #{tpu_custom_call.1} parent=1 // pred_region
      %99 = dma.done [#allocation3], 128
    $region49: #{tpu_custom_call.1} parent=1 // pred_fallthru
      _
    // Predicated region
    $region50: #{tpu_custom_call.1} parent=1 // pred_check
      _
    $region51: #{tpu_custom_call.1} parent=1 // pred_check_branch
      %101 = sbr.rel (0) target = $region53
    $region52: #{tpu_custom_call.1} parent=1 // pred_region
      %102 = dma.done [#allocation6], 16
    $region53: #{tpu_custom_call.1} parent=1 // pred_fallthru
      _
    // Predicated region
    $region54: #{tpu_custom_call.1} parent=1 // pred_check
      _
    $region55: #{tpu_custom_call.1} parent=1 // pred_check_branch
      %104 = sbr.rel (0) target = $region57
    $region56: #{tpu_custom_call.1} parent=1 // pred_region
      %105 = dma.done [#allocation6], 1024
    $region57: #{tpu_custom_call.1} parent=1 // pred_fallthru
      _
    // Predicated region
    $region58: #{tpu_custom_call.1} parent=1 // pred_check
      _
    $region59: #{tpu_custom_call.1} parent=1 // pred_check_branch
      %107 = sbr.rel (0) target = $region61
    $region60: #{tpu_custom_call.1} parent=1 // pred_region
      %108 = dma.done [#allocation9], 64
    $region61: #{tpu_custom_call.1} parent=1 // pred_fallthru
      _
    // Predicated region
    $region62: #{tpu_custom_call.1} parent=1 // pred_check
      _
    $region63: #{tpu_custom_call.1} parent=1 // pred_check_branch
      %110 = sbr.rel (0) target = $region65
    $region64: #{tpu_custom_call.1} parent=1 // pred_region
      %111 = dma.done [#allocation9], 12288
    $region65: #{tpu_custom_call.1} parent=1 // pred_fallthru
      _
    // Predicated region
    $region66: #{tpu_custom_call.1} parent=1 // pred_check
      _
    $region67: #{tpu_custom_call.1} parent=1 // pred_check_branch
      %113 = sbr.rel (0) target = $region69
    $region68: #{tpu_custom_call.1} parent=1 // pred_region
      %114 = dma.done [#allocation12], 3072
    $region69: #{tpu_custom_call.1} parent=1 // pred_fallthru
      _
    %v116 = vld [vmem:[#allocation2] sm:$0xff]
    %vm117 = vcmask 261120
    %v118 = vsel %vm117, %v116, 0.0
    %v119 = vrot.slane %v118, 4
    %v120 = vadd.f32 %v118, %v119
    %v121 = vrot.slane %v120, 2
    %v122 = vadd.f32 %v120, %v121
    %v123 = vrot.slane %v122, 1
    %v124 = vadd.f32 %v122, %v123
    %v125 = vrcp.pop 8.0
    %v126 = vmul.f32 %v124, %v125
    %v127 = vmul.f32 %v116, %v116
    %v128 = vsel %vm117, %v127, 0.0
    %v129 = vrot.slane %v128, 4
    %v130 = vadd.f32 %v128, %v129
    %v131 = vrot.slane %v130, 2
    %v132 = vadd.f32 %v130, %v131
    %v133 = vrot.slane %v132, 1
    %v134 = vadd.f32 %v132, %v133
    %v135 = vmul.f32 %v134, %v125
    %v136 = vmul.f32 %v126, %v126
    %v137 = vsub.f32 %v135, %v136
    %v138 = vmax.f32 %v137, 0.0
    %v139 = vsub.f32 %v116, %v126
    %v140 = vadd.f32 %v138, 1e-05
    %v141 = vrsqrt.pop %v140
    %v142 = vmul.f32 %v139, %v141
    %v143 = vld [vmem:[%s1] sm:$0x1]
    %v145 = vlaneseq
    %v146 = vshrl.u32 %v145, 7
    %v147 = vsub.s32 0, %v146
    %v148 = vrot.slane %v143, %v147
    %v150 = vmul.f32 %v142, %v148
    %v151 = vld [vmem:[#allocation5] sm:$0x1]
    %v153 = vlaneseq
    %v154 = vshrl.u32 %v153, 7
    %v155 = vsub.s32 0, %v154
    %v156 = vrot.slane %v151, %v155
    %v158 = vadd.f32 %v150, %v156
    %v159 = vpack.c.bf16 %v158, %v158
    %v160 = vld [vmem:[#allocation7] sm:$0xff]
    %v161 = vld [vmem:[#allocation7 + $0x8] sm:$0xff]
    %v162 = vld [vmem:[#allocation7 + $0x10] sm:$0xff]
    %v163 = vld [vmem:[#allocation7 + $0x18] sm:$0xff]
    %v164 = vld [vmem:[#allocation7 + $0x20] sm:$0xff]
    %v165 = vld [vmem:[#allocation7 + $0x28] sm:$0xff]
    %v166 = vld [vmem:[#allocation7 + $0x30] sm:$0xff]
    %v167 = vld [vmem:[#allocation7 + $0x38] sm:$0xff]
    %v168 = vld [vmem:[%s4] sm:$0xf]
    %v170 = vlaneseq
    %v171 = vshrl.u32 %v170, 7
    %v172 = vsub.s32 0, %v171
    %v173 = vrot.slane %v168, %v172
    %v174 = vlaneseq
    %v175 = vshrl.u32 %v174, 7
    %v176 = vsub.s32 1, %v175
    %v177 = vrot.slane %v168, %v176
    %v178 = vlaneseq
    %v179 = vshrl.u32 %v178, 7
    %v180 = vsub.s32 2, %v179
    %v181 = vrot.slane %v168, %v180
    %v182 = vlaneseq
    %v183 = vshrl.u32 %v182, 7
    %v184 = vsub.s32 3, %v183
    %v185 = vrot.slane %v168, %v184
    %v198 = vunpack.c.l.b16 %v160
    %v199 = vunpack.c.h.b16 %v160
    %v200 = vunpack.c.l.b16 %v161
    %v201 = vunpack.c.h.b16 %v161
    %v202 = vunpack.c.l.b16 %v162
    %v203 = vunpack.c.h.b16 %v162
    %v204 = vunpack.c.l.b16 %v163
    %v205 = vunpack.c.h.b16 %v163
    %v206 = vunpack.c.l.b16 %v164
    %v207 = vunpack.c.h.b16 %v164
    %v208 = vunpack.c.l.b16 %v165
    %v209 = vunpack.c.h.b16 %v165
    %v210 = vunpack.c.l.b16 %v166
    %v211 = vunpack.c.h.b16 %v166
    %v212 = vunpack.c.l.b16 %v167
    %v213 = vunpack.c.h.b16 %v167
    %v214 = vpack.c.b16 %v202, %v198
    %v215 = vpack.c.b16 %v203, %v199
    %v216 = vpack.c.b16 %v204, %v200
    %v217 = vpack.c.b16 %v205, %v201
    %v218 = vpack.c.b16 %v210, %v206
    %v219 = vpack.c.b16 %v211, %v207
    %v220 = vpack.c.b16 %v212, %v208
    %v221 = vpack.c.b16 %v213, %v209
    %v231 = vsel %vm117, %v159, 0
    %233 = vmatprep.subr.bf16.mxu0 0
    %234 = vmatpush1.bf16.msra.mxu0 0
    %235 = vmatprep.subr.bf16.mxu0 0
    %236 = vmatpush1.bf16.msra.mxu0 0
    %237 = vmatprep.subr.bf16.mxu0 0
    %238 = vmatpush1.bf16.msra.mxu0 0
    %239 = vmatprep.subr.bf16.mxu0 0
    %240 = vmatpush1.bf16.msra.mxu0 0
    %241 = vmatprep.subr.bf16.mxu0 0
    %242 = vmatpush1.bf16.msra.mxu0 0
    %243 = vmatprep.subr.bf16.mxu0 0
    %244 = vmatpush1.bf16.msra.mxu0 0
    %245 = vmatprep.subr.bf16.mxu0 %v219
    %246 = vmatpush1.bf16.msra.mxu0 %v218
    %247 = vmatprep.subr.bf16.mxu0 %v215
    %248 = vmatpush1.bf16.msra.mxu0 %v214
    %249 = vmatprep.subr.bf16.mxu0 0
    %250 = vmatpush2.bf16.msra.mxu0 0
    %251 = vmatprep.subr.bf16.mxu0 0
    %252 = vmatpush2.bf16.msra.mxu0 0
    %253 = vmatprep.subr.bf16.mxu0 0
    %254 = vmatpush2.bf16.msra.mxu0 0
    %255 = vmatprep.subr.bf16.mxu0 0
    %256 = vmatpush2.bf16.msra.mxu0 0
    %257 = vmatprep.subr.bf16.mxu0 0
    %258 = vmatpush2.bf16.msra.mxu0 0
    %259 = vmatprep.subr.bf16.mxu0 0
    %260 = vmatpush2.bf16.msra.mxu0 0
    %261 = vmatprep.subr.bf16.mxu0 0
    %262 = vmatpush2.bf16.msra.mxu0 0
    %263 = vmatprep.subr.bf16.mxu0 0
    %264 = vmatpush2.bf16.msra.mxu0 0
    %265 = vmatprep.mubr.bf16.mxu0 0
    %266 = vmatmul.mubr.bf16.gmra.mxu0 %v231
    %v267 = vpop.f32.mrf.mxu0
    %v268 = vadd.f32 %v173, %v267
    %v269 = vpop.f32.mrf.mxu0
    %v270 = vadd.f32 %v177, %v269
    %v271 = vpop.f32.mrf.mxu0
    %v272 = vpop.f32.mrf.mxu0
    %273 = vdwg.mxu0
    %274 = vmatprep.subr.bf16.mxu0 0
    %275 = vmatpush1.bf16.msra.mxu0 0
    %276 = vmatprep.subr.bf16.mxu0 0
    %277 = vmatpush1.bf16.msra.mxu0 0
    %278 = vmatprep.subr.bf16.mxu0 0
    %279 = vmatpush1.bf16.msra.mxu0 0
    %280 = vmatprep.subr.bf16.mxu0 0
    %281 = vmatpush1.bf16.msra.mxu0 0
    %282 = vmatprep.subr.bf16.mxu0 0
    %283 = vmatpush1.bf16.msra.mxu0 0
    %284 = vmatprep.subr.bf16.mxu0 0
    %285 = vmatpush1.bf16.msra.mxu0 0
    %286 = vmatprep.subr.bf16.mxu0 %v221
    %287 = vmatpush1.bf16.msra.mxu0 %v220
    %288 = vmatprep.subr.bf16.mxu0 %v217
    %289 = vmatpush1.bf16.msra.mxu0 %v216
    %290 = vmatprep.subr.bf16.mxu0 0
    %291 = vmatpush2.bf16.msra.mxu0 0
    %292 = vmatprep.subr.bf16.mxu0 0
    %293 = vmatpush2.bf16.msra.mxu0 0
    %294 = vmatprep.subr.bf16.mxu0 0
    %295 = vmatpush2.bf16.msra.mxu0 0
    %296 = vmatprep.subr.bf16.mxu0 0
    %297 = vmatpush2.bf16.msra.mxu0 0
    %298 = vmatprep.subr.bf16.mxu0 0
    %299 = vmatpush2.bf16.msra.mxu0 0
    %300 = vmatprep.subr.bf16.mxu0 0
    %301 = vmatpush2.bf16.msra.mxu0 0
    %302 = vmatprep.subr.bf16.mxu0 0
    %303 = vmatpush2.bf16.msra.mxu0 0
    %304 = vmatprep.subr.bf16.mxu0 0
    %305 = vmatpush2.bf16.msra.mxu0 0
    %306 = vmatprep.mubr.bf16.mxu0 0
    %307 = vmatmul.mubr.bf16.gmra.mxu0 %v231
    %v308 = vpop.f32.mrf.mxu0
    %v309 = vadd.f32 %v181, %v308
    %v310 = vpop.f32.mrf.mxu0
    %v311 = vadd.f32 %v185, %v310
    %v312 = vpop.f32.mrf.mxu0
    %v313 = vpop.f32.mrf.mxu0
    %314 = vdwg.mxu0
    %v315 = vrot.slane %v268, 4
    %v316 = vadd.f32 %v268, %v315
    %v317 = vrot.slane %v316, 2
    %v318 = vadd.f32 %v316, %v317
    %v319 = vrot.slane %v318, 1
    %v320 = vadd.f32 %v318, %v319
    %v321 = vrot.slane %v270, 4
    %v322 = vadd.f32 %v270, %v321
    %v323 = vrot.slane %v322, 2
    %v324 = vadd.f32 %v322, %v323
    %v325 = vrot.slane %v324, 1
    %v326 = vadd.f32 %v324, %v325
    %v327 = vrot.slane %v309, 4
    %v328 = vadd.f32 %v309, %v327
    %v329 = vrot.slane %v328, 2
    %v330 = vadd.f32 %v328, %v329
    %v331 = vrot.slane %v330, 1
    %v332 = vadd.f32 %v330, %v331
    %v333 = vrot.slane %v311, 4
    %v334 = vadd.f32 %v311, %v333
    %v335 = vrot.slane %v334, 2
    %v336 = vadd.f32 %v334, %v335
    %v337 = vrot.slane %v336, 1
    %v338 = vadd.f32 %v336, %v337
    %v339 = vmul.f32 %v320, %v125
    %v340 = vmul.f32 %v326, %v125
    %v341 = vmul.f32 %v332, %v125
    %v342 = vmul.f32 %v338, %v125
    %v343 = vmul.f32 %v268, %v268
    %v344 = vmul.f32 %v270, %v270
    %v345 = vmul.f32 %v309, %v309
    %v346 = vmul.f32 %v311, %v311
    %v347 = vrot.slane %v343, 4
    %v348 = vadd.f32 %v343, %v347
    %v349 = vrot.slane %v348, 2
    %v350 = vadd.f32 %v348, %v349
    %v351 = vrot.slane %v350, 1
    %v352 = vadd.f32 %v350, %v351
    %v353 = vrot.slane %v344, 4
    %v354 = vadd.f32 %v344, %v353
    %v355 = vrot.slane %v354, 2
    %v356 = vadd.f32 %v354, %v355
    %v357 = vrot.slane %v356, 1
    %v358 = vadd.f32 %v356, %v357
    %v359 = vrot.slane %v345, 4
    %v360 = vadd.f32 %v345, %v359
    %v361 = vrot.slane %v360, 2
    %v362 = vadd.f32 %v360, %v361
    %v363 = vrot.slane %v362, 1
    %v364 = vadd.f32 %v362, %v363
    %v365 = vrot.slane %v346, 4
    %v366 = vadd.f32 %v346, %v365
    %v367 = vrot.slane %v366, 2
    %v368 = vadd.f32 %v366, %v367
    %v369 = vrot.slane %v368, 1
    %v370 = vadd.f32 %v368, %v369
    %v371 = vmul.f32 %v352, %v125
    %v372 = vmul.f32 %v358, %v125
    %v373 = vmul.f32 %v364, %v125
    %v374 = vmul.f32 %v370, %v125
    %v375 = vmul.f32 %v339, %v339
    %v376 = vmul.f32 %v340, %v340
    %v377 = vmul.f32 %v341, %v341
    %v378 = vmul.f32 %v342, %v342
    %v379 = vsub.f32 %v371, %v375
    %v380 = vsub.f32 %v372, %v376
    %v381 = vsub.f32 %v373, %v377
    %v382 = vsub.f32 %v374, %v378
    %v383 = vmax.f32 %v379, 0.0
    %v384 = vmax.f32 %v380, 0.0
    %v385 = vmax.f32 %v381, 0.0
    %v386 = vmax.f32 %v382, 0.0
    %v387 = vsub.f32 %v268, %v339
    %v388 = vsub.f32 %v270, %v340
    %v389 = vsub.f32 %v309, %v341
    %v390 = vsub.f32 %v311, %v342
    %v391 = vadd.f32 %v383, 1e-05
    %v392 = vadd.f32 %v384, 1e-05
    %v393 = vadd.f32 %v385, 1e-05
    %v394 = vadd.f32 %v386, 1e-05
    %v395 = vrsqrt.pop %v391
    %v396 = vrsqrt.pop %v392
    %v397 = vrsqrt.pop %v393
    %v398 = vrsqrt.pop %v394
    %v399 = vmul.f32 %v387, %v395
    %v400 = vmul.f32 %v388, %v396
    %v401 = vmul.f32 %v389, %v397
    %v402 = vmul.f32 %v390, %v398
    %v403 = vld [vmem:[%s5] sm:$0xf]
    %v405 = vlaneseq
    %v406 = vshrl.u32 %v405, 7
    %v407 = vsub.s32 0, %v406
    %v408 = vrot.slane %v403, %v407
    %v409 = vlaneseq
    %v410 = vshrl.u32 %v409, 7
    %v411 = vsub.s32 1, %v410
    %v412 = vrot.slane %v403, %v411
    %v413 = vlaneseq
    %v414 = vshrl.u32 %v413, 7
    %v415 = vsub.s32 2, %v414
    %v416 = vrot.slane %v403, %v415
    %v417 = vlaneseq
    %v418 = vshrl.u32 %v417, 7
    %v419 = vsub.s32 3, %v418
    %v420 = vrot.slane %v403, %v419
    %v425 = vmul.f32 %v399, %v408
    %v426 = vmul.f32 %v400, %v412
    %v427 = vmul.f32 %v401, %v416
    %v428 = vmul.f32 %v402, %v420
    %v429 = vld [vmem:[#allocation8] sm:$0xf]
    %v431 = vlaneseq
    %v432 = vshrl.u32 %v431, 7
    %v433 = vsub.s32 0, %v432
    %v434 = vrot.slane %v429, %v433
    %v435 = vlaneseq
    %v436 = vshrl.u32 %v435, 7
    %v437 = vsub.s32 1, %v436
    %v438 = vrot.slane %v429, %v437
    %v439 = vlaneseq
    %v440 = vshrl.u32 %v439, 7
    %v441 = vsub.s32 2, %v440
    %v442 = vrot.slane %v429, %v441
    %v443 = vlaneseq
    %v444 = vshrl.u32 %v443, 7
    %v445 = vsub.s32 3, %v444
    %v446 = vrot.slane %v429, %v445
    %v451 = vadd.f32 %v425, %v434
    %v452 = vadd.f32 %v426, %v438
    %v453 = vadd.f32 %v427, %v442
    %v454 = vadd.f32 %v428, %v446
    %v455 = vmax.f32 %v451, 0.0
    %v456 = vmax.f32 %v452, 0.0
    %v457 = vmax.f32 %v453, 0.0
    %v458 = vmax.f32 %v454, 0.0
    %v459 = vpack.c.bf16 %v455, %v455
    %v460 = vpack.c.bf16 %v456, %v456
    %v461 = vpack.c.bf16 %v457, %v457
    %v462 = vpack.c.bf16 %v458, %v458
    %v463 = vld [vmem:[#allocation10] sm:$0xff]
    %v464 = vld [vmem:[#allocation10 + $0x8] sm:$0xf]
    %v465 = vld [vmem:[#allocation10 + $0xc] sm:$0xff]
    %v466 = vld [vmem:[#allocation10 + $0x14] sm:$0xf]
    %v467 = vld [vmem:[#allocation10 + $0x18] sm:$0xff]
    %v468 = vld [vmem:[#allocation10 + $0x20] sm:$0xf]
    %v469 = vld [vmem:[#allocation10 + $0x24] sm:$0xff]
    %v470 = vld [vmem:[#allocation10 + $0x2c] sm:$0xf]
    %v471 = vld [vmem:[#allocation10 + $0x30] sm:$0xff]
    %v472 = vld [vmem:[#allocation10 + $0x38] sm:$0xf]
    %v473 = vld [vmem:[#allocation10 + $0x3c] sm:$0xff]
    %v474 = vld [vmem:[#allocation10 + $0x44] sm:$0xf]
    %v475 = vld [vmem:[#allocation10 + $0x48] sm:$0xff]
    %v476 = vld [vmem:[#allocation10 + $0x50] sm:$0xf]
    %v477 = vld [vmem:[#allocation10 + $0x54] sm:$0xff]
    %v478 = vld [vmem:[#allocation10 + $0x5c] sm:$0xf]
    %v479 = vld [vmem:[#allocation10 + $0x60] sm:$0xff]
    %v480 = vld [vmem:[#allocation10 + $0x68] sm:$0xf]
    %v481 = vld [vmem:[#allocation10 + $0x6c] sm:$0xff]
    %v482 = vld [vmem:[#allocation10 + $0x74] sm:$0xf]
    %v483 = vld [vmem:[#allocation10 + $0x78] sm:$0xff]
    %v484 = vld [vmem:[#allocation10 + $0x80] sm:$0xf]
    %v485 = vld [vmem:[#allocation10 + $0x84] sm:$0xff]
    %v486 = vld [vmem:[#allocation10 + $0x8c] sm:$0xf]
    %v487 = vld [vmem:[#allocation10 + $0x90] sm:$0xff]
    %v488 = vld [vmem:[#allocation10 + $0x98] sm:$0xf]
    %v489 = vld [vmem:[#allocation10 + $0x9c] sm:$0xff]
    %v490 = vld [vmem:[#allocation10 + $0xa4] sm:$0xf]
    %v491 = vld [vmem:[#allocation10 + $0xa8] sm:$0xff]
    %v492 = vld [vmem:[#allocation10 + $0xb0] sm:$0xf]
    %v493 = vld [vmem:[#allocation10 + $0xb4] sm:$0xff]
    %v494 = vld [vmem:[#allocation10 + $0xbc] sm:$0xf]
    %v495 = vld [vmem:[#allocation10 + $0xc0] sm:$0xff]
    %v496 = vld [vmem:[#allocation10 + $0xc8] sm:$0xf]
    %v497 = vld [vmem:[#allocation10 + $0xcc] sm:$0xff]
    %v498 = vld [vmem:[#allocation10 + $0xd4] sm:$0xf]
    %v499 = vld [vmem:[#allocation10 + $0xd8] sm:$0xff]
    %v500 = vld [vmem:[#allocation10 + $0xe0] sm:$0xf]
    %v501 = vld [vmem:[#allocation10 + $0xe4] sm:$0xff]
    %v502 = vld [vmem:[#allocation10 + $0xec] sm:$0xf]
    %v503 = vld [vmem:[#allocation10 + $0xf0] sm:$0xff]
    %v504 = vld [vmem:[#allocation10 + $0xf8] sm:$0xf]
    %v505 = vld [vmem:[#allocation10 + $0xfc] sm:$0xff]
    %v506 = vld [vmem:[#allocation10 + $0x104] sm:$0xf]
    %v507 = vld [vmem:[#allocation10 + $0x108] sm:$0xff]
    %v508 = vld [vmem:[#allocation10 + $0x110] sm:$0xf]
    %v509 = vld [vmem:[#allocation10 + $0x114] sm:$0xff]
    %v510 = vld [vmem:[#allocation10 + $0x11c] sm:$0xf]
    %v511 = vld [vmem:[#allocation10 + $0x120] sm:$0xff]
    %v512 = vld [vmem:[#allocation10 + $0x128] sm:$0xf]
    %v513 = vld [vmem:[#allocation10 + $0x12c] sm:$0xff]
    %v514 = vld [vmem:[#allocation10 + $0x134] sm:$0xf]
    %v515 = vld [vmem:[#allocation10 + $0x138] sm:$0xff]
    %v516 = vld [vmem:[#allocation10 + $0x140] sm:$0xf]
    %v517 = vld [vmem:[#allocation10 + $0x144] sm:$0xff]
    %v518 = vld [vmem:[#allocation10 + $0x14c] sm:$0xf]
    %v519 = vld [vmem:[#allocation10 + $0x150] sm:$0xff]
    %v520 = vld [vmem:[#allocation10 + $0x158] sm:$0xf]
    %v521 = vld [vmem:[#allocation10 + $0x15c] sm:$0xff]
    %v522 = vld [vmem:[#allocation10 + $0x164] sm:$0xf]
    %v523 = vld [vmem:[#allocation10 + $0x168] sm:$0xff]
    %v524 = vld [vmem:[#allocation10 + $0x170] sm:$0xf]
    %v525 = vld [vmem:[#allocation10 + $0x174] sm:$0xff]
    %v526 = vld [vmem:[#allocation10 + $0x17c] sm:$0xf]
    %v527 = vld [vmem:[#allocation10 + $0x180] sm:$0xff]
    %v528 = vld [vmem:[#allocation10 + $0x188] sm:$0xf]
    %v529 = vld [vmem:[#allocation10 + $0x18c] sm:$0xff]
    %v530 = vld [vmem:[#allocation10 + $0x194] sm:$0xf]
    %v531 = vld [vmem:[#allocation10 + $0x198] sm:$0xff]
    %v532 = vld [vmem:[#allocation10 + $0x1a0] sm:$0xf]
    %v533 = vld [vmem:[#allocation10 + $0x1a4] sm:$0xff]
    %v534 = vld [vmem:[#allocation10 + $0x1ac] sm:$0xf]
    %v535 = vld [vmem:[#allocation10 + $0x1b0] sm:$0xff]
    %v536 = vld [vmem:[#allocation10 + $0x1b8] sm:$0xf]
    %v537 = vld [vmem:[#allocation10 + $0x1bc] sm:$0xff]
    %v538 = vld [vmem:[#allocation10 + $0x1c4] sm:$0xf]
    %v539 = vld [vmem:[#allocation10 + $0x1c8] sm:$0xff]
    %v540 = vld [vmem:[#allocation10 + $0x1d0] sm:$0xf]
    %v541 = vld [vmem:[#allocation10 + $0x1d4] sm:$0xff]
    %v542 = vld [vmem:[#allocation10 + $0x1dc] sm:$0xf]
    %v543 = vld [vmem:[#allocation10 + $0x1e0] sm:$0xff]
    %v544 = vld [vmem:[#allocation10 + $0x1e8] sm:$0xf]
    %v545 = vld [vmem:[#allocation10 + $0x1ec] sm:$0xff]
    %v546 = vld [vmem:[#allocation10 + $0x1f4] sm:$0xf]
    %v547 = vld [vmem:[#allocation10 + $0x1f8] sm:$0xff]
    %v548 = vld [vmem:[#allocation10 + $0x200] sm:$0xf]
    %v549 = vld [vmem:[#allocation10 + $0x204] sm:$0xff]
    %v550 = vld [vmem:[#allocation10 + $0x20c] sm:$0xf]
    %v551 = vld [vmem:[#allocation10 + $0x210] sm:$0xff]
    %v552 = vld [vmem:[#allocation10 + $0x218] sm:$0xf]
    %v553 = vld [vmem:[#allocation10 + $0x21c] sm:$0xff]
    %v554 = vld [vmem:[#allocation10 + $0x224] sm:$0xf]
    %v555 = vld [vmem:[#allocation10 + $0x228] sm:$0xff]
    %v556 = vld [vmem:[#allocation10 + $0x230] sm:$0xf]
    %v557 = vld [vmem:[#allocation10 + $0x234] sm:$0xff]
    %v558 = vld [vmem:[#allocation10 + $0x23c] sm:$0xf]
    %v559 = vld [vmem:[#allocation10 + $0x240] sm:$0xff]
    %v560 = vld [vmem:[#allocation10 + $0x248] sm:$0xf]
    %v561 = vld [vmem:[#allocation10 + $0x24c] sm:$0xff]
    %v562 = vld [vmem:[#allocation10 + $0x254] sm:$0xf]
    %v563 = vld [vmem:[#allocation10 + $0x258] sm:$0xff]
    %v564 = vld [vmem:[#allocation10 + $0x260] sm:$0xf]
    %v565 = vld [vmem:[#allocation10 + $0x264] sm:$0xff]
    %v566 = vld [vmem:[#allocation10 + $0x26c] sm:$0xf]
    %v567 = vld [vmem:[#allocation10 + $0x270] sm:$0xff]
    %v568 = vld [vmem:[#allocation10 + $0x278] sm:$0xf]
    %v569 = vld [vmem:[#allocation10 + $0x27c] sm:$0xff]
    %v570 = vld [vmem:[#allocation10 + $0x284] sm:$0xf]
    %v571 = vld [vmem:[#allocation10 + $0x288] sm:$0xff]
    %v572 = vld [vmem:[#allocation10 + $0x290] sm:$0xf]
    %v573 = vld [vmem:[#allocation10 + $0x294] sm:$0xff]
    %v574 = vld [vmem:[#allocation10 + $0x29c] sm:$0xf]
    %v575 = vld [vmem:[#allocation10 + $0x2a0] sm:$0xff]
    %v576 = vld [vmem:[#allocation10 + $0x2a8] sm:$0xf]
    %v577 = vld [vmem:[#allocation10 + $0x2ac] sm:$0xff]
    %v578 = vld [vmem:[#allocation10 + $0x2b4] sm:$0xf]
    %v579 = vld [vmem:[#allocation10 + $0x2b8] sm:$0xff]
    %v580 = vld [vmem:[#allocation10 + $0x2c0] sm:$0xf]
    %v581 = vld [vmem:[#allocation10 + $0x2c4] sm:$0xff]
    %v582 = vld [vmem:[#allocation10 + $0x2cc] sm:$0xf]
    %v583 = vld [vmem:[#allocation10 + $0x2d0] sm:$0xff]
    %v584 = vld [vmem:[#allocation10 + $0x2d8] sm:$0xf]
    %v585 = vld [vmem:[#allocation10 + $0x2dc] sm:$0xff]
    %v586 = vld [vmem:[#allocation10 + $0x2e4] sm:$0xf]
    %v587 = vld [vmem:[#allocation10 + $0x2e8] sm:$0xff]
    %v588 = vld [vmem:[#allocation10 + $0x2f0] sm:$0xf]
    %v589 = vld [vmem:[#allocation10 + $0x2f4] sm:$0xff]
    %v590 = vld [vmem:[#allocation10 + $0x2fc] sm:$0xf]
    %v591 = vld [vmem:[%s8] sm:$0x7]
    %v593 = vlaneseq
    %v594 = vshrl.u32 %v593, 7
    %v595 = vsub.s32 0, %v594
    %v596 = vrot.slane %v591, %v595
    %v597 = vlaneseq
    %v598 = vshrl.u32 %v597, 7
    %v599 = vsub.s32 1, %v598
    %v600 = vrot.slane %v591, %v599
    %v601 = vlaneseq
    %v602 = vshrl.u32 %v601, 7
    %v603 = vsub.s32 2, %v602
    %v604 = vrot.slane %v591, %v603
    %v736 = vunpack.c.l.b16 %v463
    %v737 = vunpack.c.h.b16 %v463
    %v738 = vunpack.c.l.b16 %v464
    %v739 = vunpack.c.l.b16 %v465
    %v740 = vunpack.c.h.b16 %v465
    %v741 = vunpack.c.l.b16 %v466
    %v742 = vunpack.c.l.b16 %v467
    %v743 = vunpack.c.h.b16 %v467
    %v744 = vunpack.c.l.b16 %v468
    %v745 = vunpack.c.l.b16 %v469
    %v746 = vunpack.c.h.b16 %v469
    %v747 = vunpack.c.l.b16 %v470
    %v748 = vunpack.c.l.b16 %v471
    %v749 = vunpack.c.h.b16 %v471
    %v750 = vunpack.c.l.b16 %v472
    %v751 = vunpack.c.l.b16 %v473
    %v752 = vunpack.c.h.b16 %v473
    %v753 = vunpack.c.l.b16 %v474
    %v754 = vunpack.c.l.b16 %v475
    %v755 = vunpack.c.h.b16 %v475
    %v756 = vunpack.c.l.b16 %v476
    %v757 = vunpack.c.l.b16 %v477
    %v758 = vunpack.c.h.b16 %v477
    %v759 = vunpack.c.l.b16 %v478
    %v760 = vunpack.c.l.b16 %v479
    %v761 = vunpack.c.h.b16 %v479
    %v762 = vunpack.c.l.b16 %v480
    %v763 = vunpack.c.l.b16 %v481
    %v764 = vunpack.c.h.b16 %v481
    %v765 = vunpack.c.l.b16 %v482
    %v766 = vunpack.c.l.b16 %v483
    %v767 = vunpack.c.h.b16 %v483
    %v768 = vunpack.c.l.b16 %v484
    %v769 = vunpack.c.l.b16 %v485
    %v770 = vunpack.c.h.b16 %v485
    %v771 = vunpack.c.l.b16 %v486
    %v772 = vunpack.c.l.b16 %v487
    %v773 = vunpack.c.h.b16 %v487
    %v774 = vunpack.c.l.b16 %v488
    %v775 = vunpack.c.l.b16 %v489
    %v776 = vunpack.c.h.b16 %v489
    %v777 = vunpack.c.l.b16 %v490
    %v778 = vunpack.c.l.b16 %v491
    %v779 = vunpack.c.h.b16 %v491
    %v780 = vunpack.c.l.b16 %v492
    %v781 = vunpack.c.l.b16 %v493
    %v782 = vunpack.c.h.b16 %v493
    %v783 = vunpack.c.l.b16 %v494
    %v784 = vunpack.c.l.b16 %v495
    %v785 = vunpack.c.h.b16 %v495
    %v786 = vunpack.c.l.b16 %v496
    %v787 = vunpack.c.l.b16 %v497
    %v788 = vunpack.c.h.b16 %v497
    %v789 = vunpack.c.l.b16 %v498
    %v790 = vunpack.c.l.b16 %v499
    %v791 = vunpack.c.h.b16 %v499
    %v792 = vunpack.c.l.b16 %v500
    %v793 = vunpack.c.l.b16 %v501
    %v794 = vunpack.c.h.b16 %v501
    %v795 = vunpack.c.l.b16 %v502
    %v796 = vunpack.c.l.b16 %v503
    %v797 = vunpack.c.h.b16 %v503
    %v798 = vunpack.c.l.b16 %v504
    %v799 = vunpack.c.l.b16 %v505
    %v800 = vunpack.c.h.b16 %v505
    %v801 = vunpack.c.l.b16 %v506
    %v802 = vunpack.c.l.b16 %v507
    %v803 = vunpack.c.h.b16 %v507
    %v804 = vunpack.c.l.b16 %v508
    %v805 = vunpack.c.l.b16 %v509
    %v806 = vunpack.c.h.b16 %v509
    %v807 = vunpack.c.l.b16 %v510
    %v808 = vunpack.c.l.b16 %v511
    %v809 = vunpack.c.h.b16 %v511
    %v810 = vunpack.c.l.b16 %v512
    %v811 = vunpack.c.l.b16 %v513
    %v812 = vunpack.c.h.b16 %v513
    %v813 = vunpack.c.l.b16 %v514
    %v814 = vunpack.c.l.b16 %v515
    %v815 = vunpack.c.h.b16 %v515
    %v816 = vunpack.c.l.b16 %v516
    %v817 = vunpack.c.l.b16 %v517
    %v818 = vunpack.c.h.b16 %v517
    %v819 = vunpack.c.l.b16 %v518
    %v820 = vunpack.c.l.b16 %v519
    %v821 = vunpack.c.h.b16 %v519
    %v822 = vunpack.c.l.b16 %v520
    %v823 = vunpack.c.l.b16 %v521
    %v824 = vunpack.c.h.b16 %v521
    %v825 = vunpack.c.l.b16 %v522
    %v826 = vunpack.c.l.b16 %v523
    %v827 = vunpack.c.h.b16 %v523
    %v828 = vunpack.c.l.b16 %v524
    %v829 = vunpack.c.l.b16 %v525
    %v830 = vunpack.c.h.b16 %v525
    %v831 = vunpack.c.l.b16 %v526
    %v832 = vunpack.c.l.b16 %v527
    %v833 = vunpack.c.h.b16 %v527
    %v834 = vunpack.c.l.b16 %v528
    %v835 = vunpack.c.l.b16 %v529
    %v836 = vunpack.c.h.b16 %v529
    %v837 = vunpack.c.l.b16 %v530
    %v838 = vunpack.c.l.b16 %v531
    %v839 = vunpack.c.h.b16 %v531
    %v840 = vunpack.c.l.b16 %v532
    %v841 = vunpack.c.l.b16 %v533
    %v842 = vunpack.c.h.b16 %v533
    %v843 = vunpack.c.l.b16 %v534
    %v844 = vunpack.c.l.b16 %v535
    %v845 = vunpack.c.h.b16 %v535
    %v846 = vunpack.c.l.b16 %v536
    %v847 = vunpack.c.l.b16 %v537
    %v848 = vunpack.c.h.b16 %v537
    %v849 = vunpack.c.l.b16 %v538
    %v850 = vunpack.c.l.b16 %v539
    %v851 = vunpack.c.h.b16 %v539
    %v852 = vunpack.c.l.b16 %v540
    %v853 = vunpack.c.l.b16 %v541
    %v854 = vunpack.c.h.b16 %v541
    %v855 = vunpack.c.l.b16 %v542
    %v856 = vunpack.c.l.b16 %v543
    %v857 = vunpack.c.h.b16 %v543
    %v858 = vunpack.c.l.b16 %v544
    %v859 = vunpack.c.l.b16 %v545
    %v860 = vunpack.c.h.b16 %v545
    %v861 = vunpack.c.l.b16 %v546
    %v862 = vunpack.c.l.b16 %v547
    %v863 = vunpack.c.h.b16 %v547
    %v864 = vunpack.c.l.b16 %v548
    %v865 = vunpack.c.l.b16 %v549
    %v866 = vunpack.c.h.b16 %v549
    %v867 = vunpack.c.l.b16 %v550
    %v868 = vunpack.c.l.b16 %v551
    %v869 = vunpack.c.h.b16 %v551
    %v870 = vunpack.c.l.b16 %v552
    %v871 = vunpack.c.l.b16 %v553
    %v872 = vunpack.c.h.b16 %v553
    %v873 = vunpack.c.l.b16 %v554
    %v874 = vunpack.c.l.b16 %v555
    %v875 = vunpack.c.h.b16 %v555
    %v876 = vunpack.c.l.b16 %v556
    %v877 = vunpack.c.l.b16 %v557
    %v878 = vunpack.c.h.b16 %v557
    %v879 = vunpack.c.l.b16 %v558
    %v880 = vunpack.c.l.b16 %v559
    %v881 = vunpack.c.h.b16 %v559
    %v882 = vunpack.c.l.b16 %v560
    %v883 = vunpack.c.l.b16 %v561
    %v884 = vunpack.c.h.b16 %v561
    %v885 = vunpack.c.l.b16 %v562
    %v886 = vunpack.c.l.b16 %v563
    %v887 = vunpack.c.h.b16 %v563
    %v888 = vunpack.c.l.b16 %v564
    %v889 = vunpack.c.l.b16 %v565
    %v890 = vunpack.c.h.b16 %v565
    %v891 = vunpack.c.l.b16 %v566
    %v892 = vunpack.c.l.b16 %v567
    %v893 = vunpack.c.h.b16 %v567
    %v894 = vunpack.c.l.b16 %v568
    %v895 = vunpack.c.l.b16 %v569
    %v896 = vunpack.c.h.b16 %v569
    %v897 = vunpack.c.l.b16 %v570
    %v898 = vunpack.c.l.b16 %v571
    %v899 = vunpack.c.h.b16 %v571
    %v900 = vunpack.c.l.b16 %v572
    %v901 = vunpack.c.l.b16 %v573
    %v902 = vunpack.c.h.b16 %v573
    %v903 = vunpack.c.l.b16 %v574
    %v904 = vunpack.c.l.b16 %v575
    %v905 = vunpack.c.h.b16 %v575
    %v906 = vunpack.c.l.b16 %v576
    %v907 = vunpack.c.l.b16 %v577
    %v908 = vunpack.c.h.b16 %v577
    %v909 = vunpack.c.l.b16 %v578
    %v910 = vunpack.c.l.b16 %v579
    %v911 = vunpack.c.h.b16 %v579
    %v912 = vunpack.c.l.b16 %v580
    %v913 = vunpack.c.l.b16 %v581
    %v914 = vunpack.c.h.b16 %v581
    %v915 = vunpack.c.l.b16 %v582
    %v916 = vunpack.c.l.b16 %v583
    %v917 = vunpack.c.h.b16 %v583
    %v918 = vunpack.c.l.b16 %v584
    %v919 = vunpack.c.l.b16 %v585
    %v920 = vunpack.c.h.b16 %v585
    %v921 = vunpack.c.l.b16 %v586
    %v922 = vunpack.c.l.b16 %v587
    %v923 = vunpack.c.h.b16 %v587
    %v924 = vunpack.c.l.b16 %v588
    %v925 = vunpack.c.l.b16 %v589
    %v926 = vunpack.c.h.b16 %v589
    %v927 = vunpack.c.l.b16 %v590
    %v928 = vpack.c.b16 %v739, %v736
    %v929 = vpack.c.b16 %v740, %v737
    %v930 = vpack.c.b16 %v741, %v738
    %v931 = vpack.c.b16 %v745, %v742
    %v932 = vpack.c.b16 %v746, %v743
    %v933 = vpack.c.b16 %v747, %v744
    %v934 = vpack.c.b16 %v751, %v748
    %v935 = vpack.c.b16 %v752, %v749
    %v936 = vpack.c.b16 %v753, %v750
    %v937 = vpack.c.b16 %v757, %v754
    %v938 = vpack.c.b16 %v758, %v755
    %v939 = vpack.c.b16 %v759, %v756
    %v940 = vpack.c.b16 %v763, %v760
    %v941 = vpack.c.b16 %v764, %v761
    %v942 = vpack.c.b16 %v765, %v762
    %v943 = vpack.c.b16 %v769, %v766
    %v944 = vpack.c.b16 %v770, %v767
    %v945 = vpack.c.b16 %v771, %v768
    %v946 = vpack.c.b16 %v775, %v772
    %v947 = vpack.c.b16 %v776, %v773
    %v948 = vpack.c.b16 %v777, %v774
    %v949 = vpack.c.b16 %v781, %v778
    %v950 = vpack.c.b16 %v782, %v779
    %v951 = vpack.c.b16 %v783, %v780
    %v952 = vpack.c.b16 %v787, %v784
    %v953 = vpack.c.b16 %v788, %v785
    %v954 = vpack.c.b16 %v789, %v786
    %v955 = vpack.c.b16 %v793, %v790
    %v956 = vpack.c.b16 %v794, %v791
    %v957 = vpack.c.b16 %v795, %v792
    %v958 = vpack.c.b16 %v799, %v796
    %v959 = vpack.c.b16 %v800, %v797
    %v960 = vpack.c.b16 %v801, %v798
    %v961 = vpack.c.b16 %v805, %v802
    %v962 = vpack.c.b16 %v806, %v803
    %v963 = vpack.c.b16 %v807, %v804
    %v964 = vpack.c.b16 %v811, %v808
    %v965 = vpack.c.b16 %v812, %v809
    %v966 = vpack.c.b16 %v813, %v810
    %v967 = vpack.c.b16 %v817, %v814
    %v968 = vpack.c.b16 %v818, %v815
    %v969 = vpack.c.b16 %v819, %v816
    %v970 = vpack.c.b16 %v823, %v820
    %v971 = vpack.c.b16 %v824, %v821
    %v972 = vpack.c.b16 %v825, %v822
    %v973 = vpack.c.b16 %v829, %v826
    %v974 = vpack.c.b16 %v830, %v827
    %v975 = vpack.c.b16 %v831, %v828
    %v976 = vpack.c.b16 %v835, %v832
    %v977 = vpack.c.b16 %v836, %v833
    %v978 = vpack.c.b16 %v837, %v834
    %v979 = vpack.c.b16 %v841, %v838
    %v980 = vpack.c.b16 %v842, %v839
    %v981 = vpack.c.b16 %v843, %v840
    %v982 = vpack.c.b16 %v847, %v844
    %v983 = vpack.c.b16 %v848, %v845
    %v984 = vpack.c.b16 %v849, %v846
    %v985 = vpack.c.b16 %v853, %v850
    %v986 = vpack.c.b16 %v854, %v851
    %v987 = vpack.c.b16 %v855, %v852
    %v988 = vpack.c.b16 %v859, %v856
    %v989 = vpack.c.b16 %v860, %v857
    %v990 = vpack.c.b16 %v861, %v858
    %v991 = vpack.c.b16 %v865, %v862
    %v992 = vpack.c.b16 %v866, %v863
    %v993 = vpack.c.b16 %v867, %v864
    %v994 = vpack.c.b16 %v871, %v868
    %v995 = vpack.c.b16 %v872, %v869
    %v996 = vpack.c.b16 %v873, %v870
    %v997 = vpack.c.b16 %v877, %v874
    %v998 = vpack.c.b16 %v878, %v875
    %v999 = vpack.c.b16 %v879, %v876
    %v1000 = vpack.c.b16 %v883, %v880
    %v1001 = vpack.c.b16 %v884, %v881
    %v1002 = vpack.c.b16 %v885, %v882
    %v1003 = vpack.c.b16 %v889, %v886
    %v1004 = vpack.c.b16 %v890, %v887
    %v1005 = vpack.c.b16 %v891, %v888
    %v1006 = vpack.c.b16 %v895, %v892
    %v1007 = vpack.c.b16 %v896, %v893
    %v1008 = vpack.c.b16 %v897, %v894
    %v1009 = vpack.c.b16 %v901, %v898
    %v1010 = vpack.c.b16 %v902, %v899
    %v1011 = vpack.c.b16 %v903, %v900
    %v1012 = vpack.c.b16 %v907, %v904
    %v1013 = vpack.c.b16 %v908, %v905
    %v1014 = vpack.c.b16 %v909, %v906
    %v1015 = vpack.c.b16 %v913, %v910
    %v1016 = vpack.c.b16 %v914, %v911
    %v1017 = vpack.c.b16 %v915, %v912
    %v1018 = vpack.c.b16 %v919, %v916
    %v1019 = vpack.c.b16 %v920, %v917
    %v1020 = vpack.c.b16 %v921, %v918
    %v1021 = vpack.c.b16 %v925, %v922
    %v1022 = vpack.c.b16 %v926, %v923
    %v1023 = vpack.c.b16 %v927, %v924
    %1120 = vmatprep.subr.bf16.mxu0 %v950
    %1121 = vmatpush1.bf16.msra.mxu0 %v949
    %1122 = vmatprep.subr.bf16.mxu0 %v947
    %1123 = vmatpush1.bf16.msra.mxu0 %v946
    %1124 = vmatprep.subr.bf16.mxu0 %v944
    %1125 = vmatpush1.bf16.msra.mxu0 %v943
    %1126 = vmatprep.subr.bf16.mxu0 %v941
    %1127 = vmatpush1.bf16.msra.mxu0 %v940
    %1128 = vmatprep.subr.bf16.mxu0 %v938
    %1129 = vmatpush1.bf16.msra.mxu0 %v937
    %1130 = vmatprep.subr.bf16.mxu0 %v935
    %1131 = vmatpush1.bf16.msra.mxu0 %v934
    %1132 = vmatprep.subr.bf16.mxu0 %v932
    %1133 = vmatpush1.bf16.msra.mxu0 %v931
    %1134 = vmatprep.subr.bf16.mxu0 %v929
    %1135 = vmatpush1.bf16.msra.mxu0 %v928
    %1136 = vmatprep.subr.bf16.mxu0 %v974
    %1137 = vmatpush2.bf16.msra.mxu0 %v973
    %1138 = vmatprep.subr.bf16.mxu0 %v971
    %1139 = vmatpush2.bf16.msra.mxu0 %v970
    %1140 = vmatprep.subr.bf16.mxu0 %v968
    %1141 = vmatpush2.bf16.msra.mxu0 %v967
    %1142 = vmatprep.subr.bf16.mxu0 %v965
    %1143 = vmatpush2.bf16.msra.mxu0 %v964
    %1144 = vmatprep.subr.bf16.mxu0 %v962
    %1145 = vmatpush2.bf16.msra.mxu0 %v961
    %1146 = vmatprep.subr.bf16.mxu0 %v959
    %1147 = vmatpush2.bf16.msra.mxu0 %v958
    %1148 = vmatprep.subr.bf16.mxu0 %v956
    %1149 = vmatpush2.bf16.msra.mxu0 %v955
    %1150 = vmatprep.subr.bf16.mxu0 %v953
    %1151 = vmatpush2.bf16.msra.mxu0 %v952
    %1152 = vmatprep.mubr.bf16.mxu0 %v460
    %1153 = vmatmul.mubr.bf16.gmra.mxu0 %v459
    %v1154 = vpop.f32.mrf.mxu0
    %v1155 = vadd.f32 %v596, %v1154
    %v1156 = vpop.f32.mrf.mxu0
    %v1157 = vadd.f32 %v600, %v1156
    %v1158 = vpop.f32.mrf.mxu0
    %v1159 = vpop.f32.mrf.mxu0
    %1160 = vdwg.mxu0
    %1161 = vmatprep.subr.bf16.mxu0 %v998
    %1162 = vmatpush1.bf16.msra.mxu0 %v997
    %1163 = vmatprep.subr.bf16.mxu0 %v995
    %1164 = vmatpush1.bf16.msra.mxu0 %v994
    %1165 = vmatprep.subr.bf16.mxu0 %v992
    %1166 = vmatpush1.bf16.msra.mxu0 %v991
    %1167 = vmatprep.subr.bf16.mxu0 %v989
    %1168 = vmatpush1.bf16.msra.mxu0 %v988
    %1169 = vmatprep.subr.bf16.mxu0 %v986
    %1170 = vmatpush1.bf16.msra.mxu0 %v985
    %1171 = vmatprep.subr.bf16.mxu0 %v983
    %1172 = vmatpush1.bf16.msra.mxu0 %v982
    %1173 = vmatprep.subr.bf16.mxu0 %v980
    %1174 = vmatpush1.bf16.msra.mxu0 %v979
    %1175 = vmatprep.subr.bf16.mxu0 %v977
    %1176 = vmatpush1.bf16.msra.mxu0 %v976
    %1177 = vmatprep.subr.bf16.mxu0 %v1022
    %1178 = vmatpush2.bf16.msra.mxu0 %v1021
    %1179 = vmatprep.subr.bf16.mxu0 %v1019
    %1180 = vmatpush2.bf16.msra.mxu0 %v1018
    %1181 = vmatprep.subr.bf16.mxu0 %v1016
    %1182 = vmatpush2.bf16.msra.mxu0 %v1015
    %1183 = vmatprep.subr.bf16.mxu0 %v1013
    %1184 = vmatpush2.bf16.msra.mxu0 %v1012
    %1185 = vmatprep.subr.bf16.mxu0 %v1010
    %1186 = vmatpush2.bf16.msra.mxu0 %v1009
    %1187 = vmatprep.subr.bf16.mxu0 %v1007
    %1188 = vmatpush2.bf16.msra.mxu0 %v1006
    %1189 = vmatprep.subr.bf16.mxu0 %v1004
    %1190 = vmatpush2.bf16.msra.mxu0 %v1003
    %1191 = vmatprep.subr.bf16.mxu0 %v1001
    %1192 = vmatpush2.bf16.msra.mxu0 %v1000
    %1193 = vmatprep.mubr.bf16.mxu0 %v462
    %1194 = vmatmul.mubr.bf16.gmra.mxu0 %v461
    %v1195 = vpop.f32.mrf.mxu0
    %v1196 = vadd.f32 %v1155, %v1195
    %v1197 = vpop.f32.mrf.mxu0
    %v1198 = vadd.f32 %v1157, %v1197
    %v1199 = vpop.f32.mrf.mxu0
    %v1200 = vpop.f32.mrf.mxu0
    %1201 = vdwg.mxu0
    %1202 = vmatprep.subr.bf16.mxu0 0
    %1203 = vmatpush1.bf16.msra.mxu0 %v951
    %1204 = vmatprep.subr.bf16.mxu0 0
    %1205 = vmatpush1.bf16.msra.mxu0 %v948
    %1206 = vmatprep.subr.bf16.mxu0 0
    %1207 = vmatpush1.bf16.msra.mxu0 %v945
    %1208 = vmatprep.subr.bf16.mxu0 0
    %1209 = vmatpush1.bf16.msra.mxu0 %v942
    %1210 = vmatprep.subr.bf16.mxu0 0
    %1211 = vmatpush1.bf16.msra.mxu0 %v939
    %1212 = vmatprep.subr.bf16.mxu0 0
    %1213 = vmatpush1.bf16.msra.mxu0 %v936
    %1214 = vmatprep.subr.bf16.mxu0 0
    %1215 = vmatpush1.bf16.msra.mxu0 %v933
    %1216 = vmatprep.subr.bf16.mxu0 0
    %1217 = vmatpush1.bf16.msra.mxu0 %v930
    %1218 = vmatprep.subr.bf16.mxu0 0
    %1219 = vmatpush2.bf16.msra.mxu0 %v975
    %1220 = vmatprep.subr.bf16.mxu0 0
    %1221 = vmatpush2.bf16.msra.mxu0 %v972
    %1222 = vmatprep.subr.bf16.mxu0 0
    %1223 = vmatpush2.bf16.msra.mxu0 %v969
    %1224 = vmatprep.subr.bf16.mxu0 0
    %1225 = vmatpush2.bf16.msra.mxu0 %v966
    %1226 = vmatprep.subr.bf16.mxu0 0
    %1227 = vmatpush2.bf16.msra.mxu0 %v963
    %1228 = vmatprep.subr.bf16.mxu0 0
    %1229 = vmatpush2.bf16.msra.mxu0 %v960
    %1230 = vmatprep.subr.bf16.mxu0 0
    %1231 = vmatpush2.bf16.msra.mxu0 %v957
    %1232 = vmatprep.subr.bf16.mxu0 0
    %1233 = vmatpush2.bf16.msra.mxu0 %v954
    %1234 = vmatprep.mubr.bf16.mxu0 %v460
    %1235 = vmatmul.mubr.bf16.gmra.mxu0 %v459
    %v1236 = vpop.f32.mrf.mxu0
    %v1237 = vadd.f32 %v604, %v1236
    %v1238 = vpop.f32.mrf.mxu0
    %v1239 = vpop.f32.mrf.mxu0
    %v1240 = vpop.f32.mrf.mxu0
    %1241 = vdwg.mxu0
    %1242 = vmatprep.subr.bf16.mxu0 0
    %1243 = vmatpush1.bf16.msra.mxu0 %v999
    %1244 = vmatprep.subr.bf16.mxu0 0
    %1245 = vmatpush1.bf16.msra.mxu0 %v996
    %1246 = vmatprep.subr.bf16.mxu0 0
    %1247 = vmatpush1.bf16.msra.mxu0 %v993
    %1248 = vmatprep.subr.bf16.mxu0 0
    %1249 = vmatpush1.bf16.msra.mxu0 %v990
    %1250 = vmatprep.subr.bf16.mxu0 0
    %1251 = vmatpush1.bf16.msra.mxu0 %v987
    %1252 = vmatprep.subr.bf16.mxu0 0
    %1253 = vmatpush1.bf16.msra.mxu0 %v984
    %1254 = vmatprep.subr.bf16.mxu0 0
    %1255 = vmatpush1.bf16.msra.mxu0 %v981
    %1256 = vmatprep.subr.bf16.mxu0 0
    %1257 = vmatpush1.bf16.msra.mxu0 %v978
    %1258 = vmatprep.subr.bf16.mxu0 0
    %1259 = vmatpush2.bf16.msra.mxu0 %v1023
    %1260 = vmatprep.subr.bf16.mxu0 0
    %1261 = vmatpush2.bf16.msra.mxu0 %v1020
    %1262 = vmatprep.subr.bf16.mxu0 0
    %1263 = vmatpush2.bf16.msra.mxu0 %v1017
    %1264 = vmatprep.subr.bf16.mxu0 0
    %1265 = vmatpush2.bf16.msra.mxu0 %v1014
    %1266 = vmatprep.subr.bf16.mxu0 0
    %1267 = vmatpush2.bf16.msra.mxu0 %v1011
    %1268 = vmatprep.subr.bf16.mxu0 0
    %1269 = vmatpush2.bf16.msra.mxu0 %v1008
    %1270 = vmatprep.subr.bf16.mxu0 0
    %1271 = vmatpush2.bf16.msra.mxu0 %v1005
    %1272 = vmatprep.subr.bf16.mxu0 0
    %1273 = vmatpush2.bf16.msra.mxu0 %v1002
    %1274 = vmatprep.mubr.bf16.mxu0 %v462
    %1275 = vmatmul.mubr.bf16.gmra.mxu0 %v461
    %v1276 = vpop.f32.mrf.mxu0
    %v1277 = vadd.f32 %v1237, %v1276
    %v1278 = vpop.f32.mrf.mxu0
    %v1279 = vpop.f32.mrf.mxu0
    %v1280 = vpop.f32.mrf.mxu0
    %1281 = vdwg.mxu0
    %v1282 = vmax.f32 %v1196, 0.0
    %v1283 = vmax.f32 %v1198, 0.0
    %v1284 = vmax.f32 %v1277, 0.0
    %v1285 = vpack.c.bf16 %v1282, %v1282
    %v1286 = vpack.c.bf16 %v1283, %v1283
    %v1287 = vpack.c.bf16 %v1284, %v1284
    %v1288 = vld [vmem:[#allocation11] sm:$0xf]
    %v1289 = vld [vmem:[#allocation11 + $0x4] sm:$0xf]
    %v1290 = vld [vmem:[#allocation11 + $0x8] sm:$0xf]
    %v1291 = vld [vmem:[#allocation11 + $0xc] sm:$0xf]
    %v1292 = vld [vmem:[#allocation11 + $0x10] sm:$0xf]
    %v1293 = vld [vmem:[#allocation11 + $0x14] sm:$0xf]
    %v1294 = vld [vmem:[#allocation11 + $0x18] sm:$0xf]
    %v1295 = vld [vmem:[#allocation11 + $0x1c] sm:$0xf]
    %v1296 = vld [vmem:[#allocation11 + $0x20] sm:$0xf]
    %v1297 = vld [vmem:[#allocation11 + $0x24] sm:$0xf]
    %v1298 = vld [vmem:[#allocation11 + $0x28] sm:$0xf]
    %v1299 = vld [vmem:[#allocation11 + $0x2c] sm:$0xf]
    %v1300 = vld [vmem:[#allocation11 + $0x30] sm:$0xf]
    %v1301 = vld [vmem:[#allocation11 + $0x34] sm:$0xf]
    %v1302 = vld [vmem:[#allocation11 + $0x38] sm:$0xf]
    %v1303 = vld [vmem:[#allocation11 + $0x3c] sm:$0xf]
    %v1304 = vld [vmem:[#allocation11 + $0x40] sm:$0xf]
    %v1305 = vld [vmem:[#allocation11 + $0x44] sm:$0xf]
    %v1306 = vld [vmem:[#allocation11 + $0x48] sm:$0xf]
    %v1307 = vld [vmem:[#allocation11 + $0x4c] sm:$0xf]
    %v1308 = vld [vmem:[#allocation11 + $0x50] sm:$0xf]
    %v1309 = vld [vmem:[#allocation11 + $0x54] sm:$0xf]
    %v1310 = vld [vmem:[#allocation11 + $0x58] sm:$0xf]
    %v1311 = vld [vmem:[#allocation11 + $0x5c] sm:$0xf]
    %v1312 = vld [vmem:[#allocation11 + $0x60] sm:$0xf]
    %v1313 = vld [vmem:[#allocation11 + $0x64] sm:$0xf]
    %v1314 = vld [vmem:[#allocation11 + $0x68] sm:$0xf]
    %v1315 = vld [vmem:[#allocation11 + $0x6c] sm:$0xf]
    %v1316 = vld [vmem:[#allocation11 + $0x70] sm:$0xf]
    %v1317 = vld [vmem:[#allocation11 + $0x74] sm:$0xf]
    %v1318 = vld [vmem:[#allocation11 + $0x78] sm:$0xf]
    %v1319 = vld [vmem:[#allocation11 + $0x7c] sm:$0xf]
    %v1320 = vld [vmem:[#allocation11 + $0x80] sm:$0xf]
    %v1321 = vld [vmem:[#allocation11 + $0x84] sm:$0xf]
    %v1322 = vld [vmem:[#allocation11 + $0x88] sm:$0xf]
    %v1323 = vld [vmem:[#allocation11 + $0x8c] sm:$0xf]
    %v1324 = vld [vmem:[#allocation11 + $0x90] sm:$0xf]
    %v1325 = vld [vmem:[#allocation11 + $0x94] sm:$0xf]
    %v1326 = vld [vmem:[#allocation11 + $0x98] sm:$0xf]
    %v1327 = vld [vmem:[#allocation11 + $0x9c] sm:$0xf]
    %v1328 = vld [vmem:[#allocation11 + $0xa0] sm:$0xf]
    %v1329 = vld [vmem:[#allocation11 + $0xa4] sm:$0xf]
    %v1330 = vld [vmem:[#allocation11 + $0xa8] sm:$0xf]
    %v1331 = vld [vmem:[#allocation11 + $0xac] sm:$0xf]
    %v1332 = vld [vmem:[#allocation11 + $0xb0] sm:$0xf]
    %v1333 = vld [vmem:[#allocation11 + $0xb4] sm:$0xf]
    %v1334 = vld [vmem:[#allocation11 + $0xb8] sm:$0xf]
    %v1335 = vld [vmem:[#allocation11 + $0xbc] sm:$0xf]
    %v1336 = vld [vmem:[%s10] sm:$0x1]
    %v1338 = vlaneseq
    %v1339 = vshrl.u32 %v1338, 7
    %v1340 = vsub.s32 0, %v1339
    %v1341 = vrot.slane %v1336, %v1340
    %v1391 = vunpack.c.l.b16 %v1288
    %v1392 = vunpack.c.l.b16 %v1289
    %v1393 = vunpack.c.l.b16 %v1290
    %v1394 = vunpack.c.l.b16 %v1291
    %v1395 = vunpack.c.l.b16 %v1292
    %v1396 = vunpack.c.l.b16 %v1293
    %v1397 = vunpack.c.l.b16 %v1294
    %v1398 = vunpack.c.l.b16 %v1295
    %v1399 = vunpack.c.l.b16 %v1296
    %v1400 = vunpack.c.l.b16 %v1297
    %v1401 = vunpack.c.l.b16 %v1298
    %v1402 = vunpack.c.l.b16 %v1299
    %v1403 = vunpack.c.l.b16 %v1300
    %v1404 = vunpack.c.l.b16 %v1301
    %v1405 = vunpack.c.l.b16 %v1302
    %v1406 = vunpack.c.l.b16 %v1303
    %v1407 = vunpack.c.l.b16 %v1304
    %v1408 = vunpack.c.l.b16 %v1305
    %v1409 = vunpack.c.l.b16 %v1306
    %v1410 = vunpack.c.l.b16 %v1307
    %v1411 = vunpack.c.l.b16 %v1308
    %v1412 = vunpack.c.l.b16 %v1309
    %v1413 = vunpack.c.l.b16 %v1310
    %v1414 = vunpack.c.l.b16 %v1311
    %v1415 = vunpack.c.l.b16 %v1312
    %v1416 = vunpack.c.l.b16 %v1313
    %v1417 = vunpack.c.l.b16 %v1314
    %v1418 = vunpack.c.l.b16 %v1315
    %v1419 = vunpack.c.l.b16 %v1316
    %v1420 = vunpack.c.l.b16 %v1317
    %v1421 = vunpack.c.l.b16 %v1318
    %v1422 = vunpack.c.l.b16 %v1319
    %v1423 = vunpack.c.l.b16 %v1320
    %v1424 = vunpack.c.l.b16 %v1321
    %v1425 = vunpack.c.l.b16 %v1322
    %v1426 = vunpack.c.l.b16 %v1323
    %v1427 = vunpack.c.l.b16 %v1324
    %v1428 = vunpack.c.l.b16 %v1325
    %v1429 = vunpack.c.l.b16 %v1326
    %v1430 = vunpack.c.l.b16 %v1327
    %v1431 = vunpack.c.l.b16 %v1328
    %v1432 = vunpack.c.l.b16 %v1329
    %v1433 = vunpack.c.l.b16 %v1330
    %v1434 = vunpack.c.l.b16 %v1331
    %v1435 = vunpack.c.l.b16 %v1332
    %v1436 = vunpack.c.l.b16 %v1333
    %v1437 = vunpack.c.l.b16 %v1334
    %v1438 = vunpack.c.l.b16 %v1335
    %v1439 = vpack.c.b16 %v1392, %v1391
    %v1440 = vpack.c.b16 %v1394, %v1393
    %v1441 = vpack.c.b16 %v1396, %v1395
    %v1442 = vpack.c.b16 %v1398, %v1397
    %v1443 = vpack.c.b16 %v1400, %v1399
    %v1444 = vpack.c.b16 %v1402, %v1401
    %v1445 = vpack.c.b16 %v1404, %v1403
    %v1446 = vpack.c.b16 %v1406, %v1405
    %v1447 = vpack.c.b16 %v1408, %v1407
    %v1448 = vpack.c.b16 %v1410, %v1409
    %v1449 = vpack.c.b16 %v1412, %v1411
    %v1450 = vpack.c.b16 %v1414, %v1413
    %v1451 = vpack.c.b16 %v1416, %v1415
    %v1452 = vpack.c.b16 %v1418, %v1417
    %v1453 = vpack.c.b16 %v1420, %v1419
    %v1454 = vpack.c.b16 %v1422, %v1421
    %v1455 = vpack.c.b16 %v1424, %v1423
    %v1456 = vpack.c.b16 %v1426, %v1425
    %v1457 = vpack.c.b16 %v1428, %v1427
    %v1458 = vpack.c.b16 %v1430, %v1429
    %v1459 = vpack.c.b16 %v1432, %v1431
    %v1460 = vpack.c.b16 %v1434, %v1433
    %v1461 = vpack.c.b16 %v1436, %v1435
    %v1462 = vpack.c.b16 %v1438, %v1437
    %1487 = vmatprep.subr.bf16.mxu0 0
    %1488 = vmatpush1.bf16.msra.mxu0 %v1446
    %1489 = vmatprep.subr.bf16.mxu0 0
    %1490 = vmatpush1.bf16.msra.mxu0 %v1445
    %1491 = vmatprep.subr.bf16.mxu0 0
    %1492 = vmatpush1.bf16.msra.mxu0 %v1444
    %1493 = vmatprep.subr.bf16.mxu0 0
    %1494 = vmatpush1.bf16.msra.mxu0 %v1443
    %1495 = vmatprep.subr.bf16.mxu0 0
    %1496 = vmatpush1.bf16.msra.mxu0 %v1442
    %1497 = vmatprep.subr.bf16.mxu0 0
    %1498 = vmatpush1.bf16.msra.mxu0 %v1441
    %1499 = vmatprep.subr.bf16.mxu0 0
    %1500 = vmatpush1.bf16.msra.mxu0 %v1440
    %1501 = vmatprep.subr.bf16.mxu0 0
    %1502 = vmatpush1.bf16.msra.mxu0 %v1439
    %1503 = vmatprep.subr.bf16.mxu0 0
    %1504 = vmatpush2.bf16.msra.mxu0 %v1454
    %1505 = vmatprep.subr.bf16.mxu0 0
    %1506 = vmatpush2.bf16.msra.mxu0 %v1453
    %1507 = vmatprep.subr.bf16.mxu0 0
    %1508 = vmatpush2.bf16.msra.mxu0 %v1452
    %1509 = vmatprep.subr.bf16.mxu0 0
    %1510 = vmatpush2.bf16.msra.mxu0 %v1451
    %1511 = vmatprep.subr.bf16.mxu0 0
    %1512 = vmatpush2.bf16.msra.mxu0 %v1450
    %1513 = vmatprep.subr.bf16.mxu0 0
    %1514 = vmatpush2.bf16.msra.mxu0 %v1449
    %1515 = vmatprep.subr.bf16.mxu0 0
    %1516 = vmatpush2.bf16.msra.mxu0 %v1448
    %1517 = vmatprep.subr.bf16.mxu0 0
    %1518 = vmatpush2.bf16.msra.mxu0 %v1447
    %1519 = vmatprep.mubr.bf16.mxu0 %v1286
    %1520 = vmatmul.mubr.bf16.gmra.mxu0 %v1285
    %v1521 = vpop.f32.mrf.mxu0
    %v1522 = vadd.f32 %v1341, %v1521
    %v1523 = vpop.f32.mrf.mxu0
    %v1524 = vpop.f32.mrf.mxu0
    %v1525 = vpop.f32.mrf.mxu0
    %1526 = vdwg.mxu0
    %1527 = vmatprep.subr.bf16.mxu0 0
    %1528 = vmatpush1.bf16.msra.mxu0 %v1462
    %1529 = vmatprep.subr.bf16.mxu0 0
    %1530 = vmatpush1.bf16.msra.mxu0 %v1461
    %1531 = vmatprep.subr.bf16.mxu0 0
    %1532 = vmatpush1.bf16.msra.mxu0 %v1460
    %1533 = vmatprep.subr.bf16.mxu0 0
    %1534 = vmatpush1.bf16.msra.mxu0 %v1459
    %1535 = vmatprep.subr.bf16.mxu0 0
    %1536 = vmatpush1.bf16.msra.mxu0 %v1458
    %1537 = vmatprep.subr.bf16.mxu0 0
    %1538 = vmatpush1.bf16.msra.mxu0 %v1457
    %1539 = vmatprep.subr.bf16.mxu0 0
    %1540 = vmatpush1.bf16.msra.mxu0 %v1456
    %1541 = vmatprep.subr.bf16.mxu0 0
    %1542 = vmatpush1.bf16.msra.mxu0 %v1455
    %1543 = vmatprep.subr.bf16.mxu0 0
    %1544 = vmatpush2.bf16.msra.mxu0 0
    %1545 = vmatprep.subr.bf16.mxu0 0
    %1546 = vmatpush2.bf16.msra.mxu0 0
    %1547 = vmatprep.subr.bf16.mxu0 0
    %1548 = vmatpush2.bf16.msra.mxu0 0
    %1549 = vmatprep.subr.bf16.mxu0 0
    %1550 = vmatpush2.bf16.msra.mxu0 0
    %1551 = vmatprep.subr.bf16.mxu0 0
    %1552 = vmatpush2.bf16.msra.mxu0 0
    %1553 = vmatprep.subr.bf16.mxu0 0
    %1554 = vmatpush2.bf16.msra.mxu0 0
    %1555 = vmatprep.subr.bf16.mxu0 0
    %1556 = vmatpush2.bf16.msra.mxu0 0
    %1557 = vmatprep.subr.bf16.mxu0 0
    %1558 = vmatpush2.bf16.msra.mxu0 0
    %1559 = vmatprep.mubr.bf16.mxu0 0
    %1560 = vmatmul.mubr.bf16.gmra.mxu0 %v1287
    %v1561 = vpop.f32.mrf.mxu0
    %v1562 = vadd.f32 %v1522, %v1561
    %v1563 = vpop.f32.mrf.mxu0
    %v1564 = vpop.f32.mrf.mxu0
    %v1565 = vpop.f32.mrf.mxu0
    %1566 = vdwg.mxu0
    %v1567 = vtanh.pop %v1562
    %1568 = vst [vmem:[#allocation13] sm:$0xff] %v1567
    // Predicated region
    $region70: #{tpu_custom_call.1} parent=1 // pred_check
      _
    $region71: #{tpu_custom_call.1} parent=1 // pred_check_branch
      %1570 = sbr.rel (0) target = $region73
    $region72: #{tpu_custom_call.1} parent=1 // pred_region
      %s1572 = ssub.s32 128, 128
      %1573 = vsyncadd [#allocation4], %s1572
      %s1575 = sshll.u32 [#allocation13], 4
      %s1576 = int_to_ptr.vmem [resolvable:$true] %s1575
      %1578 = dma.vmem_to_hbm [thread:$0]  %s1576, 128, %s11, [#allocation4]
    $region73: #{tpu_custom_call.1} parent=1 // pred_fallthru
      _
    // Predicated region
    $region74: #{tpu_custom_call.1} parent=1 // pred_check
      _
    $region75: #{tpu_custom_call.1} parent=1 // pred_check_branch
      %1580 = sbr.rel (0) target = $region77
    $region76: #{tpu_custom_call.1} parent=1 // pred_region
      %1581 = dma.done [#allocation4], 128
    $region77: #{tpu_custom_call.1} parent=1 // pred_fallthru
      _
    %1582 = vsyncpa [#allocation3], 1
    %1583 = vsyncpa [#allocation6], 1
    %1584 = vsyncpa [#allocation9], 1
    %1585 = vsyncpa [#allocation12], 1
    %1586 = vsyncpa [#allocation4], 1

</llo_original>
